<compile_context>
chip_gen: v7x
topology: tpu7x:2x2x1
jax: 0.10.0
libtpu: 0.0.40
codegen_flags: <defaults>
</compile_context>

<pallas_src>
import jax
import jax.numpy as jnp
from jax.experimental import pallas as pl
from jax.experimental.pallas import tpu as pltpu

BN_EPS = 1e-5
OUT_FEATURES = 16
OUT_PAD = 128                     # lane-dense output width (multiple of 128)
_HI = jax.lax.Precision.HIGHEST   # exact f32 on the MXU


def _round_up(x, m):
    return ((x + m - 1) // m) * m


def team_stats_kernel(x_ref, w1_ref, b1_ref, w2_ref, b2_ref, w3_ref, b3_ref, o_ref):
    """One batch tile of the MLP: 3x (matmul -> bias add -> ReLU). BN is pre-folded."""
    h = jnp.dot(x_ref[...], w1_ref[...], precision=_HI,
                preferred_element_type=jnp.float32) + b1_ref[...]
    h = jnp.maximum(h, 0.0)

    h = jnp.dot(h, w2_ref[...], precision=_HI,
                preferred_element_type=jnp.float32) + b2_ref[...]
    h = jnp.maximum(h, 0.0)

    h = jnp.dot(h, w3_ref[...], precision=_HI,
                preferred_element_type=jnp.float32) + b3_ref[...]
    o_ref[...] = jnp.maximum(h, 0.0).astype(o_ref.dtype)


def fold_params(p):
    """Fold eval-mode BatchNorm (affine, applied after ReLU) into the following Linear."""
    s1 = p["g1"] * jax.lax.rsqrt(p["v1"] + BN_EPS)          # (1, 64)
    t1 = p["be1"] - p["m1"] * s1                            # (1, 64)
    w2f = s1.reshape(-1, 1) * p["w2"]                       # (64, 32)
    b2f = jnp.dot(t1, p["w2"], precision=_HI) + p["b2"]     # (1, 32)

    s2 = p["g2"] * jax.lax.rsqrt(p["v2"] + BN_EPS)          # (1, 32)
    t2 = p["be2"] - p["m2"] * s2                            # (1, 32)
    w3f = s2.reshape(-1, 1) * p["w3"]                       # (32, 16)
    b3f = jnp.dot(t2, p["w3"], precision=_HI) + p["b3"]     # (1, 16)

    # Zero-pad the final layer to 128 output lanes -> unmasked lane-dense stores.
    w3p = jnp.pad(w3f, ((0, 0), (0, OUT_PAD - OUT_FEATURES)))
    b3p = jnp.pad(b3f, ((0, 0), (0, OUT_PAD - OUT_FEATURES)))
    return p["w1"], p["b1"], w2f, b2f, w3p, b3p


def team_stats_forward(x, params, *, tile_b=512):
    """x: (N, input_size) float32. Returns (N, 16) float32."""
    n, d = x.shape
    w1, b1, w2, b2, w3, b3 = fold_params(params)

    # Batch tile: multiple of 8 (sublane), capped at tile_b; pad N up to a whole grid.
    tb = min(tile_b, _round_up(n, 8))
    n_pad = _round_up(n, tb)
    if n_pad != n:
        x = jnp.pad(x, ((0, n_pad - n), (0, 0)))
    grid = (n_pad // tb,)

    def resident(arr):
        # Full-array block, constant block index -> stays in VMEM, no re-DMA per tile.
        return pl.BlockSpec(arr.shape, lambda i: (0, 0))

    out = pl.pallas_call(
        team_stats_kernel,
        out_shape=jax.ShapeDtypeStruct((n_pad, OUT_PAD), jnp.float32),
        grid=grid,
        in_specs=[
            pl.BlockSpec((tb, d), lambda i: (i, 0)),   # x: pipelined over batch tiles
            resident(w1), resident(b1),
            resident(w2), resident(b2),
            resident(w3), resident(b3),
        ],
        out_specs=pl.BlockSpec((tb, OUT_PAD), lambda i: (i, 0)),
        compiler_params=pltpu.CompilerParams(dimension_semantics=("parallel",)),
    )(x, w1, b1, w2, b2, w3, b3)

    return out[:n, :OUT_FEATURES]


def init_params(key, input_size):
    """Deterministic init. Linear weights stored as (in, out) = W_torch.T."""
    ks = jax.random.split(key, 16)

    def lin(kw, kb, fan_in, fan_out):
        bound = 1.0 / jnp.sqrt(fan_in)
        w = jax.random.uniform(kw, (fan_in, fan_out), jnp.float32, -bound, bound)
        b = jax.random.uniform(kb, (1, fan_out), jnp.float32, -bound, bound)
        return w, b

    def bn(kg, kb, km, kv, dim):
        g = 1.0 + 0.1 * jax.random.normal(kg, (1, dim), jnp.float32)
        be = 0.1 * jax.random.normal(kb, (1, dim), jnp.float32)
        m = 0.1 * jax.random.normal(km, (1, dim), jnp.float32)
        v = 1.0 + 0.1 * jax.random.uniform(kv, (1, dim), jnp.float32)
        return g, be, m, v

    w1, b1 = lin(ks[0], ks[1], input_size, 64)
    g1, be1, m1, v1 = bn(ks[2], ks[3], ks[4], ks[5], 64)
    w2, b2 = lin(ks[6], ks[7], 64, 32)
    g2, be2, m2, v2 = bn(ks[8], ks[9], ks[10], ks[11], 32)
    w3, b3 = lin(ks[12], ks[13], 32, 16)

    return dict(
        w1=w1, b1=b1, g1=g1, be1=be1, m1=m1, v1=v1,
        w2=w2, b2=b2, g2=g2, be2=be2, m2=m2, v2=v2,
        w3=w3, b3=b3,
    )


def reference_forward(x, p):
    """Plain-JAX reference mirroring PyTorch eval-mode forward (unfused BN)."""
    h = jnp.maximum(jnp.dot(x, p["w1"], precision=_HI) + p["b1"], 0.0)
    h = (h - p["m1"]) / jnp.sqrt(p["v1"] + BN_EPS) * p["g1"] + p["be1"]
    h = jnp.maximum(jnp.dot(h, p["w2"], precision=_HI) + p["b2"], 0.0)
    h = (h - p["m2"]) / jnp.sqrt(p["v2"] + BN_EPS) * p["g2"] + p["be2"]
    return jnp.maximum(jnp.dot(h, p["w3"], precision=_HI) + p["b3"], 0.0)


if __name__ == "__main__":
    key = jax.random.PRNGKey(0)
    k_x, k_p, k_x2 = jax.random.split(key, 3)

    batch, input_size = 8, 32
    params = init_params(k_p, input_size)

    # Small smoke test (single tile).
    x = jax.random.normal(k_x, (batch, input_size), jnp.float32)
    out = jax.block_until_ready(team_stats_forward(x, params))
    ref = reference_forward(x, params)
    assert out.shape == (batch, OUT_FEATURES)
    assert jnp.allclose(out, ref, atol=1e-4, rtol=1e-4)

    # Multi-tile grid + ragged-batch padding path.
    big_batch = 1037
    x_big = jax.random.normal(k_x2, (big_batch, input_size), jnp.float32)
    out_big = jax.block_until_ready(team_stats_forward(x_big, params, tile_b=512))
    ref_big = reference_forward(x_big, params)
    assert out_big.shape == (big_batch, OUT_FEATURES)
    assert jnp.allclose(out_big, ref_big, atol=1e-4, rtol=1e-4)

    print("KERNEL_OK")
</pallas_src>

<mosaic_0001>
module attributes {stable_mosaic.version = 11 : i64} {
  func.func @team_stats_kernel(%arg0: i32, %arg1: memref<8x32xf32, #tpu.memory_space<vmem>>, %arg2: memref<32x64xf32, #tpu.memory_space<vmem>>, %arg3: memref<1x64xf32, #tpu.memory_space<vmem>>, %arg4: memref<64x32xf32, #tpu.memory_space<vmem>>, %arg5: memref<1x32xf32, #tpu.memory_space<vmem>>, %arg6: memref<32x128xf32, #tpu.memory_space<vmem>>, %arg7: memref<1x128xf32, #tpu.memory_space<vmem>>, %arg8: memref<8x128xf32, #tpu.memory_space<vmem>>) attributes {dimension_semantics = [#tpu.dimension_semantics<parallel>], iteration_bounds = array<i64: 1>, scalar_prefetch = 0 : i64, scratch_operands = 0 : i64, tpu.core_type = #tpu.core_type<tc>, window_params = [{transform_indices = @transform_0, window_bounds = array<i64: 8, 32>}, {pipeline_mode = #tpu.pipeline_mode<synchronous>, transform_indices = @transform_1, window_bounds = array<i64: 32, 64>}, {pipeline_mode = #tpu.pipeline_mode<synchronous>, transform_indices = @transform_2, window_bounds = array<i64: 1, 64>}, {pipeline_mode = #tpu.pipeline_mode<synchronous>, transform_indices = @transform_3, window_bounds = array<i64: 64, 32>}, {pipeline_mode = #tpu.pipeline_mode<synchronous>, transform_indices = @transform_4, window_bounds = array<i64: 1, 32>}, {pipeline_mode = #tpu.pipeline_mode<synchronous>, transform_indices = @transform_5, window_bounds = array<i64: 32, 128>}, {pipeline_mode = #tpu.pipeline_mode<synchronous>, transform_indices = @transform_6, window_bounds = array<i64: 1, 128>}, {transform_indices = @transform_7, window_bounds = array<i64: 8, 128>}]} {
    %c0 = arith.constant 0 : index
    %c0_0 = arith.constant 0 : index
    %0 = vector.load %arg1[%c0, %c0_0] : memref<8x32xf32, #tpu.memory_space<vmem>>, vector<8x32xf32>
    %c0_1 = arith.constant 0 : index
    %c0_2 = arith.constant 0 : index
    %1 = vector.load %arg2[%c0_1, %c0_2] : memref<32x64xf32, #tpu.memory_space<vmem>>, vector<32x64xf32>
    %cst = arith.constant dense<0.000000e+00> : vector<8x64xf32>
    %2 = tpu.matmul %0, %1, %cst {dimension_numbers = #tpu.dot_dimension_numbers<[1], [0], [0], [1], [0, 0, 1, 1], [], []>, precision = #tpu.contract_precision<fp32>} : vector<8x32xf32>, vector<32x64xf32>, vector<8x64xf32> -> vector<8x64xf32>
    %c0_3 = arith.constant 0 : index
    %c0_4 = arith.constant 0 : index
    %3 = vector.load %arg3[%c0_3, %c0_4] : memref<1x64xf32, #tpu.memory_space<vmem>>, vector<1x64xf32>
    %4 = vector.broadcast %3 : vector<1x64xf32> to vector<8x64xf32>
    %5 = arith.addf %2, %4 : vector<8x64xf32>
    %cst_5 = arith.constant 0.000000e+00 : f32
    %6 = vector.broadcast %cst_5 : f32 to vector<8x64xf32>
    %7 = arith.maximumf %5, %6 : vector<8x64xf32>
    %c0_6 = arith.constant 0 : index
    %c0_7 = arith.constant 0 : index
    %8 = vector.load %arg4[%c0_6, %c0_7] : memref<64x32xf32, #tpu.memory_space<vmem>>, vector<64x32xf32>
    %cst_8 = arith.constant dense<0.000000e+00> : vector<8x32xf32>
    %9 = tpu.matmul %7, %8, %cst_8 {dimension_numbers = #tpu.dot_dimension_numbers<[1], [0], [0], [1], [0, 0, 1, 1], [], []>, precision = #tpu.contract_precision<fp32>} : vector<8x64xf32>, vector<64x32xf32>, vector<8x32xf32> -> vector<8x32xf32>
    %c0_9 = arith.constant 0 : index
    %c0_10 = arith.constant 0 : index
    %10 = vector.load %arg5[%c0_9, %c0_10] : memref<1x32xf32, #tpu.memory_space<vmem>>, vector<1x32xf32>
    %11 = vector.broadcast %10 : vector<1x32xf32> to vector<8x32xf32>
    %12 = arith.addf %9, %11 : vector<8x32xf32>
    %cst_11 = arith.constant 0.000000e+00 : f32
    %13 = vector.broadcast %cst_11 : f32 to vector<8x32xf32>
    %14 = arith.maximumf %12, %13 : vector<8x32xf32>
    %c0_12 = arith.constant 0 : index
    %c0_13 = arith.constant 0 : index
    %15 = vector.load %arg6[%c0_12, %c0_13] : memref<32x128xf32, #tpu.memory_space<vmem>>, vector<32x128xf32>
    %cst_14 = arith.constant dense<0.000000e+00> : vector<8x128xf32>
    %16 = tpu.matmul %14, %15, %cst_14 {dimension_numbers = #tpu.dot_dimension_numbers<[1], [0], [0], [1], [0, 0, 1, 1], [], []>, precision = #tpu.contract_precision<fp32>} : vector<8x32xf32>, vector<32x128xf32>, vector<8x128xf32> -> vector<8x128xf32>
    %c0_15 = arith.constant 0 : index
    %c0_16 = arith.constant 0 : index
    %17 = vector.load %arg7[%c0_15, %c0_16] : memref<1x128xf32, #tpu.memory_space<vmem>>, vector<1x128xf32>
    %18 = vector.broadcast %17 : vector<1x128xf32> to vector<8x128xf32>
    %19 = arith.addf %16, %18 : vector<8x128xf32>
    %cst_17 = arith.constant 0.000000e+00 : f32
    %20 = vector.broadcast %cst_17 : f32 to vector<8x128xf32>
    %21 = arith.maximumf %19, %20 : vector<8x128xf32>
    %c0_18 = arith.constant 0 : index
    %c0_19 = arith.constant 0 : index
    %22 = vector.load %arg8[%c0_18, %c0_19] : memref<8x128xf32, #tpu.memory_space<vmem>>, vector<8x128xf32>
    tpu.vector_store %arg8[%c0_18, %c0_19], %21 {strides = array<i32>} : memref<8x128xf32, #tpu.memory_space<vmem>>, vector<8x128xf32>,
    return
  }
  func.func @transform_0(%arg0: i32) -> (i32, i32) {
    %c0_i32 = arith.constant 0 : i32
    %c0_i32_0 = arith.constant 0 : i32
    return %arg0, %c0_i32 : i32, i32
  }
  func.func @transform_1(%arg0: i32) -> (i32, i32) {
    %c0_i32 = arith.constant 0 : i32
    %c0_i32_0 = arith.constant 0 : i32
    %c0_i32_1 = arith.constant 0 : i32
    return %c0_i32, %c0_i32_0 : i32, i32
  }
  func.func @transform_2(%arg0: i32) -> (i32, i32) {
    %c0_i32 = arith.constant 0 : i32
    %c0_i32_0 = arith.constant 0 : i32
    %c0_i32_1 = arith.constant 0 : i32
    return %c0_i32, %c0_i32_0 : i32, i32
  }
  func.func @transform_3(%arg0: i32) -> (i32, i32) {
    %c0_i32 = arith.constant 0 : i32
    %c0_i32_0 = arith.constant 0 : i32
    %c0_i32_1 = arith.constant 0 : i32
    return %c0_i32, %c0_i32_0 : i32, i32
  }
  func.func @transform_4(%arg0: i32) -> (i32, i32) {
    %c0_i32 = arith.constant 0 : i32
    %c0_i32_0 = arith.constant 0 : i32
    %c0_i32_1 = arith.constant 0 : i32
    return %c0_i32, %c0_i32_0 : i32, i32
  }
  func.func @transform_5(%arg0: i32) -> (i32, i32) {
    %c0_i32 = arith.constant 0 : i32
    %c0_i32_0 = arith.constant 0 : i32
    %c0_i32_1 = arith.constant 0 : i32
    return %c0_i32, %c0_i32_0 : i32, i32
  }
  func.func @transform_6(%arg0: i32) -> (i32, i32) {
    %c0_i32 = arith.constant 0 : i32
    %c0_i32_0 = arith.constant 0 : i32
    %c0_i32_1 = arith.constant 0 : i32
    return %c0_i32, %c0_i32_0 : i32, i32
  }
  func.func @transform_7(%arg0: i32) -> (i32, i32) {
    %c0_i32 = arith.constant 0 : i32
    %c0_i32_0 = arith.constant 0 : i32
    return %arg0, %c0_i32 : i32, i32
  }
}

</mosaic_0001>

<llo_original>
// kernel: tpu_custom_call.1
$region0: #{tpu_custom_call.1}
  #allocation0 [shape = 'u32[]', space=smem, size = 0x4, offset = 0x4, fixed_abs, tag = 'smem constant byte address 0x4 - core index']
  #allocation1 [shape = 'u32[144,128]{1,0:T(1,128)}', space=vmem, size = 0x12000, scoped, tag = 'internal scratch']
  %s0 = inlined_call_operand.vmem [shape: f32[8,32], index: 0, kind: input, shape index: {}]
  %s1 = inlined_call_operand.vmem [shape: f32[32,64], index: 1, kind: input, shape index: {}]
  %s2 = inlined_call_operand.vmem [shape: f32[1,64], index: 2, kind: input, shape index: {}]
  %s3 = inlined_call_operand.vmem [shape: f32[64,32], index: 3, kind: input, shape index: {}]
  %s4 = inlined_call_operand.vmem [shape: f32[1,32], index: 4, kind: input, shape index: {}]
  %s5 = inlined_call_operand.vmem [shape: f32[32,128], index: 5, kind: input, shape index: {}]
  %s6 = inlined_call_operand.vmem [shape: f32[1,128], index: 6, kind: input, shape index: {}]
  %s7 = inlined_call_operand.hbm [shape: f32[8,128], index: 7, kind: output, shape index: {}]
  %s8 = sld [smem:[#allocation0]]
  $region38: #{tpu_custom_call.1} parent=0
    _
  %s10 = ssub.s32 1, %s8
  %s11 = scalar_select 0, %s10, %s8
  $region1: #{tpu_custom_call.1} parent=0
    #allocation2 [shape = 'u8[4096]{0}', space=vmem, size = 0x1000, scoped, tag = 'output window, operand 0, single buffered']
    #allocation3 [shape = 's32[1]{0}', space=sflag, size = 0x4, scoped, tag = 'scoped memory for tpu_custom_call.1']
    %12 = vsyncpa [#allocation3], 0
    // Predicated region
    $region2: #{tpu_custom_call.1} parent=1 // pred_check
      _
    $region3: #{tpu_custom_call.1} parent=1 // pred_check_branch
      %14 = sbr.rel (0) target = $region5
    $region4: #{tpu_custom_call.1} parent=1 // pred_region
      _
    $region5: #{tpu_custom_call.1} parent=1 // pred_fallthru
      _
    // Predicated region
    $region6: #{tpu_custom_call.1} parent=1 // pred_check
      _
    $region7: #{tpu_custom_call.1} parent=1 // pred_check_branch
      %16 = sbr.rel (0) target = $region9
    $region8: #{tpu_custom_call.1} parent=1 // pred_region
      _
    $region9: #{tpu_custom_call.1} parent=1 // pred_fallthru
      _
    // Predicated region
    $region10: #{tpu_custom_call.1} parent=1 // pred_check
      _
    $region11: #{tpu_custom_call.1} parent=1 // pred_check_branch
      %18 = sbr.rel (0) target = $region13
    $region12: #{tpu_custom_call.1} parent=1 // pred_region
      _
    $region13: #{tpu_custom_call.1} parent=1 // pred_fallthru
      _
    // Predicated region
    $region14: #{tpu_custom_call.1} parent=1 // pred_check
      _
    $region15: #{tpu_custom_call.1} parent=1 // pred_check_branch
      %20 = sbr.rel (0) target = $region17
    $region16: #{tpu_custom_call.1} parent=1 // pred_region
      _
    $region17: #{tpu_custom_call.1} parent=1 // pred_fallthru
      _
    // Predicated region
    $region18: #{tpu_custom_call.1} parent=1 // pred_check
      _
    $region19: #{tpu_custom_call.1} parent=1 // pred_check_branch
      %22 = sbr.rel (0) target = $region21
    $region20: #{tpu_custom_call.1} parent=1 // pred_region
      _
    $region21: #{tpu_custom_call.1} parent=1 // pred_fallthru
      _
    // Predicated region
    $region22: #{tpu_custom_call.1} parent=1 // pred_check
      _
    $region23: #{tpu_custom_call.1} parent=1 // pred_check_branch
      %24 = sbr.rel (0) target = $region25
    $region24: #{tpu_custom_call.1} parent=1 // pred_region
      _
    $region25: #{tpu_custom_call.1} parent=1 // pred_fallthru
      _
    // Predicated region
    $region26: #{tpu_custom_call.1} parent=1 // pred_check
      _
    $region27: #{tpu_custom_call.1} parent=1 // pred_check_branch
      %26 = sbr.rel (0) target = $region29
    $region28: #{tpu_custom_call.1} parent=1 // pred_region
      _
    $region29: #{tpu_custom_call.1} parent=1 // pred_fallthru
      _
    %v27 = vld [vmem:[%s0] sm:$0xff]
    %v28 = vld [vmem:[%s1] sm:$0xff]
    %v29 = vld [vmem:[%s1 + $0x8] sm:$0xff]
    %v30 = vld [vmem:[%s1 + $0x10] sm:$0xff]
    %v31 = vld [vmem:[%s1 + $0x18] sm:$0xff]
    %v32 = vld [vmem:[%s2] sm:$0x1]
    %v34 = vlaneseq
    %v35 = vshrl.u32 %v34, 7
    %v36 = vsub.s32 0, %v35
    %v37 = vrot.slane %v32, %v36
    %vm39 = vcmask 261120
    %v41 = vsel %vm39, %v27, 0
    %43 = vmatprep.subr.mxu0 0.0
    %v44 = vand.u32 %v28, 4294901760
    %45 = vmatpush1.msra.mxu0 %v44
    %46 = vmatprep.subr.mxu0 0.0
    %v47 = vand.u32 %v29, 4294901760
    %48 = vmatpush1.msra.mxu0 %v47
    %49 = vmatprep.subr.mxu0 0.0
    %v50 = vand.u32 %v30, 4294901760
    %51 = vmatpush1.msra.mxu0 %v50
    %52 = vmatprep.subr.mxu0 0.0
    %v53 = vand.u32 %v31, 4294901760
    %54 = vmatpush1.msra.mxu0 %v53
    %55 = vmatprep.subr.mxu0 0.0
    %56 = vmatpush1.msra.mxu0 0.0
    %57 = vmatprep.subr.mxu0 0.0
    %58 = vmatpush1.msra.mxu0 0.0
    %59 = vmatprep.subr.mxu0 0.0
    %60 = vmatpush1.msra.mxu0 0.0
    %61 = vmatprep.subr.mxu0 0.0
    %62 = vmatpush1.msra.mxu0 0.0
    %63 = vmatprep.subr.mxu0 0.0
    %64 = vmatpush1.msra.mxu0 0.0
    %65 = vmatprep.subr.mxu0 0.0
    %66 = vmatpush1.msra.mxu0 0.0
    %67 = vmatprep.subr.mxu0 0.0
    %68 = vmatpush1.msra.mxu0 0.0
    %69 = vmatprep.subr.mxu0 0.0
    %70 = vmatpush1.msra.mxu0 0.0
    %71 = vmatprep.subr.mxu0 0.0
    %72 = vmatpush1.msra.mxu0 0.0
    %73 = vmatprep.subr.mxu0 0.0
    %74 = vmatpush1.msra.mxu0 0.0
    %75 = vmatprep.subr.mxu0 0.0
    %76 = vmatpush1.msra.mxu0 0.0
    %77 = vmatprep.subr.mxu0 0.0
    %78 = vmatpush1.msra.mxu0 0.0
    %79 = vmatprep.subr.mxu0 0.0
    %80 = vmatpush1.msra.mxu0 0.0
    %81 = vmatprep.subr.mxu0 0.0
    %82 = vmatpush1.msra.mxu0 0.0
    %83 = vmatprep.subr.mxu0 0.0
    %84 = vmatpush1.msra.mxu0 0.0
    %85 = vmatprep.subr.mxu0 0.0
    %86 = vmatpush1.msra.mxu0 0.0
    %87 = vmatprep.subr.mxu0 0.0
    %88 = vmatpush1.msra.mxu0 0.0
    %89 = vmatprep.subr.mxu0 0.0
    %90 = vmatpush1.msra.mxu0 0.0
    %91 = vmatprep.subr.mxu0 0.0
    %92 = vmatpush1.msra.mxu0 0.0
    %93 = vmatprep.subr.mxu0 0.0
    %94 = vmatpush1.msra.mxu0 0.0
    %95 = vmatprep.subr.mxu0 0.0
    %96 = vmatpush1.msra.mxu0 0.0
    %97 = vmatprep.subr.mxu0 0.0
    %98 = vmatpush1.msra.mxu0 0.0
    %99 = vmatprep.subr.mxu0 0.0
    %100 = vmatpush1.msra.mxu0 0.0
    %101 = vmatprep.subr.mxu0 0.0
    %102 = vmatpush1.msra.mxu0 0.0
    %103 = vmatprep.subr.mxu0 0.0
    %104 = vmatpush1.msra.mxu0 0.0
    %105 = vmatprep.subr.mxu0 0.0
    %106 = vmatpush1.msra.mxu0 0.0
    %107 = vmatprep.subr.mxu0 0.0
    %108 = vmatpush1.msra.mxu0 0.0
    %109 = vmatprep.subr.mxu0 0.0
    %110 = vmatpush1.msra.mxu0 0.0
    %111 = vmatprep.mubr.f32.mxu0 0.0
    %v112 = vand.u32 %v41, 4294901760
    %v113 = vsub.f32 %v41, %v112
    %v114 = vand.u32 %v113, 4294901760
    %v115 = vsub.f32 %v113, %v114
    %v116 = vand.u32 %v115, 4294901760
    %117 = vmatmul.mubr.f32.gmra.mrb[0].mxu0 %v116
    %v118 = vpop.f32.mrb[0].mxu0
    %v119 = vadd.f32 %v37, %v118
    %v120 = vpop.f32.mrb[0].mxu0
    %121 = vdwg.mxu0
    %122 = vmatprep.subr.mxu0 0.0
    %v123 = vand.u32 %v28, 4294901760
    %v124 = vsub.f32 %v28, %v123
    %v125 = vand.u32 %v124, 4294901760
    %v126 = vsub.f32 %v124, %v125
    %v127 = vand.u32 %v126, 4294901760
    %128 = vmatpush1.msra.mxu0 %v127
    %129 = vmatprep.subr.mxu0 0.0
    %v130 = vand.u32 %v29, 4294901760
    %v131 = vsub.f32 %v29, %v130
    %v132 = vand.u32 %v131, 4294901760
    %v133 = vsub.f32 %v131, %v132
    %v134 = vand.u32 %v133, 4294901760
    %135 = vmatpush1.msra.mxu0 %v134
    %136 = vmatprep.subr.mxu0 0.0
    %v137 = vand.u32 %v30, 4294901760
    %v138 = vsub.f32 %v30, %v137
    %v139 = vand.u32 %v138, 4294901760
    %v140 = vsub.f32 %v138, %v139
    %v141 = vand.u32 %v140, 4294901760
    %142 = vmatpush1.msra.mxu0 %v141
    %143 = vmatprep.subr.mxu0 0.0
    %v144 = vand.u32 %v31, 4294901760
    %v145 = vsub.f32 %v31, %v144
    %v146 = vand.u32 %v145, 4294901760
    %v147 = vsub.f32 %v145, %v146
    %v148 = vand.u32 %v147, 4294901760
    %149 = vmatpush1.msra.mxu0 %v148
    %150 = vmatprep.subr.mxu0 0.0
    %151 = vmatpush1.msra.mxu0 0.0
    %152 = vmatprep.subr.mxu0 0.0
    %153 = vmatpush1.msra.mxu0 0.0
    %154 = vmatprep.subr.mxu0 0.0
    %155 = vmatpush1.msra.mxu0 0.0
    %156 = vmatprep.subr.mxu0 0.0
    %157 = vmatpush1.msra.mxu0 0.0
    %158 = vmatprep.subr.mxu0 0.0
    %159 = vmatpush1.msra.mxu0 0.0
    %160 = vmatprep.subr.mxu0 0.0
    %161 = vmatpush1.msra.mxu0 0.0
    %162 = vmatprep.subr.mxu0 0.0
    %163 = vmatpush1.msra.mxu0 0.0
    %164 = vmatprep.subr.mxu0 0.0
    %165 = vmatpush1.msra.mxu0 0.0
    %166 = vmatprep.subr.mxu0 0.0
    %167 = vmatpush1.msra.mxu0 0.0
    %168 = vmatprep.subr.mxu0 0.0
    %169 = vmatpush1.msra.mxu0 0.0
    %170 = vmatprep.subr.mxu0 0.0
    %171 = vmatpush1.msra.mxu0 0.0
    %172 = vmatprep.subr.mxu0 0.0
    %173 = vmatpush1.msra.mxu0 0.0
    %174 = vmatprep.subr.mxu0 0.0
    %175 = vmatpush1.msra.mxu0 0.0
    %176 = vmatprep.subr.mxu0 0.0
    %177 = vmatpush1.msra.mxu0 0.0
    %178 = vmatprep.subr.mxu0 0.0
    %179 = vmatpush1.msra.mxu0 0.0
    %180 = vmatprep.subr.mxu0 0.0
    %181 = vmatpush1.msra.mxu0 0.0
    %182 = vmatprep.subr.mxu0 0.0
    %183 = vmatpush1.msra.mxu0 0.0
    %184 = vmatprep.subr.mxu0 0.0
    %185 = vmatpush1.msra.mxu0 0.0
    %186 = vmatprep.subr.mxu0 0.0
    %187 = vmatpush1.msra.mxu0 0.0
    %188 = vmatprep.subr.mxu0 0.0
    %189 = vmatpush1.msra.mxu0 0.0
    %190 = vmatprep.subr.mxu0 0.0
    %191 = vmatpush1.msra.mxu0 0.0
    %192 = vmatprep.subr.mxu0 0.0
    %193 = vmatpush1.msra.mxu0 0.0
    %194 = vmatprep.subr.mxu0 0.0
    %195 = vmatpush1.msra.mxu0 0.0
    %196 = vmatprep.subr.mxu0 0.0
    %197 = vmatpush1.msra.mxu0 0.0
    %198 = vmatprep.subr.mxu0 0.0
    %199 = vmatpush1.msra.mxu0 0.0
    %200 = vmatprep.subr.mxu0 0.0
    %201 = vmatpush1.msra.mxu0 0.0
    %202 = vmatprep.subr.mxu0 0.0
    %203 = vmatpush1.msra.mxu0 0.0
    %204 = vmatprep.subr.mxu0 0.0
    %205 = vmatpush1.msra.mxu0 0.0
    %206 = vmatprep.mubr.f32.mxu0 0.0
    %v207 = vand.u32 %v41, 4294901760
    %208 = vmatmul.mubr.f32.gmra.mrb[0].mxu0 %v207
    %v209 = vpop.f32.mrb[0].mxu0
    %v210 = vadd.f32 %v119, %v209
    %v211 = vpop.f32.mrb[0].mxu0
    %212 = vdwg.mxu0
    %213 = vmatprep.subr.mxu0 0.0
    %v214 = vand.u32 %v28, 4294901760
    %v215 = vsub.f32 %v28, %v214
    %216 = vmatpush1.msra.mxu0 %v215
    %217 = vmatprep.subr.mxu0 0.0
    %v218 = vand.u32 %v29, 4294901760
    %v219 = vsub.f32 %v29, %v218
    %220 = vmatpush1.msra.mxu0 %v219
    %221 = vmatprep.subr.mxu0 0.0
    %v222 = vand.u32 %v30, 4294901760
    %v223 = vsub.f32 %v30, %v222
    %224 = vmatpush1.msra.mxu0 %v223
    %225 = vmatprep.subr.mxu0 0.0
    %v226 = vand.u32 %v31, 4294901760
    %v227 = vsub.f32 %v31, %v226
    %228 = vmatpush1.msra.mxu0 %v227
    %229 = vmatprep.subr.mxu0 0.0
    %230 = vmatpush1.msra.mxu0 0.0
    %231 = vmatprep.subr.mxu0 0.0
    %232 = vmatpush1.msra.mxu0 0.0
    %233 = vmatprep.subr.mxu0 0.0
    %234 = vmatpush1.msra.mxu0 0.0
    %235 = vmatprep.subr.mxu0 0.0
    %236 = vmatpush1.msra.mxu0 0.0
    %237 = vmatprep.subr.mxu0 0.0
    %238 = vmatpush1.msra.mxu0 0.0
    %239 = vmatprep.subr.mxu0 0.0
    %240 = vmatpush1.msra.mxu0 0.0
    %241 = vmatprep.subr.mxu0 0.0
    %242 = vmatpush1.msra.mxu0 0.0
    %243 = vmatprep.subr.mxu0 0.0
    %244 = vmatpush1.msra.mxu0 0.0
    %245 = vmatprep.subr.mxu0 0.0
    %246 = vmatpush1.msra.mxu0 0.0
    %247 = vmatprep.subr.mxu0 0.0
    %248 = vmatpush1.msra.mxu0 0.0
    %249 = vmatprep.subr.mxu0 0.0
    %250 = vmatpush1.msra.mxu0 0.0
    %251 = vmatprep.subr.mxu0 0.0
    %252 = vmatpush1.msra.mxu0 0.0
    %253 = vmatprep.subr.mxu0 0.0
    %254 = vmatpush1.msra.mxu0 0.0
    %255 = vmatprep.subr.mxu0 0.0
    %256 = vmatpush1.msra.mxu0 0.0
    %257 = vmatprep.subr.mxu0 0.0
    %258 = vmatpush1.msra.mxu0 0.0
    %259 = vmatprep.subr.mxu0 0.0
    %260 = vmatpush1.msra.mxu0 0.0
    %261 = vmatprep.subr.mxu0 0.0
    %262 = vmatpush1.msra.mxu0 0.0
    %263 = vmatprep.subr.mxu0 0.0
    %264 = vmatpush1.msra.mxu0 0.0
    %265 = vmatprep.subr.mxu0 0.0
    %266 = vmatpush1.msra.mxu0 0.0
    %267 = vmatprep.subr.mxu0 0.0
    %268 = vmatpush1.msra.mxu0 0.0
    %269 = vmatprep.subr.mxu0 0.0
    %270 = vmatpush1.msra.mxu0 0.0
    %271 = vmatprep.subr.mxu0 0.0
    %272 = vmatpush1.msra.mxu0 0.0
    %273 = vmatprep.subr.mxu0 0.0
    %274 = vmatpush1.msra.mxu0 0.0
    %275 = vmatprep.subr.mxu0 0.0
    %276 = vmatpush1.msra.mxu0 0.0
    %277 = vmatprep.subr.mxu0 0.0
    %278 = vmatpush1.msra.mxu0 0.0
    %279 = vmatprep.subr.mxu0 0.0
    %280 = vmatpush1.msra.mxu0 0.0
    %281 = vmatprep.subr.mxu0 0.0
    %282 = vmatpush1.msra.mxu0 0.0
    %283 = vmatprep.subr.mxu0 0.0
    %284 = vmatpush1.msra.mxu0 0.0
    %285 = vmatprep.mubr.f32.mxu0 0.0
    %v286 = vand.u32 %v41, 4294901760
    %v287 = vsub.f32 %v41, %v286
    %288 = vmatmul.mubr.f32.gmra.mrb[0].mxu0 %v287
    %v289 = vpop.f32.mrb[0].mxu0
    %v290 = vadd.f32 %v210, %v289
    %v291 = vpop.f32.mrb[0].mxu0
    %292 = vdwg.mxu0
    %293 = vmatprep.subr.mxu0 0.0
    %v294 = vand.u32 %v28, 4294901760
    %295 = vmatpush1.msra.mxu0 %v294
    %296 = vmatprep.subr.mxu0 0.0
    %v297 = vand.u32 %v29, 4294901760
    %298 = vmatpush1.msra.mxu0 %v297
    %299 = vmatprep.subr.mxu0 0.0
    %v300 = vand.u32 %v30, 4294901760
    %301 = vmatpush1.msra.mxu0 %v300
    %302 = vmatprep.subr.mxu0 0.0
    %v303 = vand.u32 %v31, 4294901760
    %304 = vmatpush1.msra.mxu0 %v303
    %305 = vmatprep.subr.mxu0 0.0
    %306 = vmatpush1.msra.mxu0 0.0
    %307 = vmatprep.subr.mxu0 0.0
    %308 = vmatpush1.msra.mxu0 0.0
    %309 = vmatprep.subr.mxu0 0.0
    %310 = vmatpush1.msra.mxu0 0.0
    %311 = vmatprep.subr.mxu0 0.0
    %312 = vmatpush1.msra.mxu0 0.0
    %313 = vmatprep.subr.mxu0 0.0
    %314 = vmatpush1.msra.mxu0 0.0
    %315 = vmatprep.subr.mxu0 0.0
    %316 = vmatpush1.msra.mxu0 0.0
    %317 = vmatprep.subr.mxu0 0.0
    %318 = vmatpush1.msra.mxu0 0.0
    %319 = vmatprep.subr.mxu0 0.0
    %320 = vmatpush1.msra.mxu0 0.0
    %321 = vmatprep.subr.mxu0 0.0
    %322 = vmatpush1.msra.mxu0 0.0
    %323 = vmatprep.subr.mxu0 0.0
    %324 = vmatpush1.msra.mxu0 0.0
    %325 = vmatprep.subr.mxu0 0.0
    %326 = vmatpush1.msra.mxu0 0.0
    %327 = vmatprep.subr.mxu0 0.0
    %328 = vmatpush1.msra.mxu0 0.0
    %329 = vmatprep.subr.mxu0 0.0
    %330 = vmatpush1.msra.mxu0 0.0
    %331 = vmatprep.subr.mxu0 0.0
    %332 = vmatpush1.msra.mxu0 0.0
    %333 = vmatprep.subr.mxu0 0.0
    %334 = vmatpush1.msra.mxu0 0.0
    %335 = vmatprep.subr.mxu0 0.0
    %336 = vmatpush1.msra.mxu0 0.0
    %337 = vmatprep.subr.mxu0 0.0
    %338 = vmatpush1.msra.mxu0 0.0
    %339 = vmatprep.subr.mxu0 0.0
    %340 = vmatpush1.msra.mxu0 0.0
    %341 = vmatprep.subr.mxu0 0.0
    %342 = vmatpush1.msra.mxu0 0.0
    %343 = vmatprep.subr.mxu0 0.0
    %344 = vmatpush1.msra.mxu0 0.0
    %345 = vmatprep.subr.mxu0 0.0
    %346 = vmatpush1.msra.mxu0 0.0
    %347 = vmatprep.subr.mxu0 0.0
    %348 = vmatpush1.msra.mxu0 0.0
    %349 = vmatprep.subr.mxu0 0.0
    %350 = vmatpush1.msra.mxu0 0.0
    %351 = vmatprep.subr.mxu0 0.0
    %352 = vmatpush1.msra.mxu0 0.0
    %353 = vmatprep.subr.mxu0 0.0
    %354 = vmatpush1.msra.mxu0 0.0
    %355 = vmatprep.subr.mxu0 0.0
    %356 = vmatpush1.msra.mxu0 0.0
    %357 = vmatprep.subr.mxu0 0.0
    %358 = vmatpush1.msra.mxu0 0.0
    %359 = vmatprep.subr.mxu0 0.0
    %360 = vmatpush1.msra.mxu0 0.0
    %361 = vmatprep.mubr.f32.mxu0 0.0
    %v362 = vand.u32 %v41, 4294901760
    %v363 = vsub.f32 %v41, %v362
    %v364 = vand.u32 %v363, 4294901760
    %365 = vmatmul.mubr.f32.gmra.mrb[0].mxu0 %v364
    %v366 = vpop.f32.mrb[0].mxu0
    %v367 = vadd.f32 %v290, %v366
    %v368 = vpop.f32.mrb[0].mxu0
    %369 = vdwg.mxu0
    %370 = vmatprep.subr.mxu0 0.0
    %v371 = vand.u32 %v28, 4294901760
    %v372 = vsub.f32 %v28, %v371
    %v373 = vand.u32 %v372, 4294901760
    %374 = vmatpush1.msra.mxu0 %v373
    %375 = vmatprep.subr.mxu0 0.0
    %v376 = vand.u32 %v29, 4294901760
    %v377 = vsub.f32 %v29, %v376
    %v378 = vand.u32 %v377, 4294901760
    %379 = vmatpush1.msra.mxu0 %v378
    %380 = vmatprep.subr.mxu0 0.0
    %v381 = vand.u32 %v30, 4294901760
    %v382 = vsub.f32 %v30, %v381
    %v383 = vand.u32 %v382, 4294901760
    %384 = vmatpush1.msra.mxu0 %v383
    %385 = vmatprep.subr.mxu0 0.0
    %v386 = vand.u32 %v31, 4294901760
    %v387 = vsub.f32 %v31, %v386
    %v388 = vand.u32 %v387, 4294901760
    %389 = vmatpush1.msra.mxu0 %v388
    %390 = vmatprep.subr.mxu0 0.0
    %391 = vmatpush1.msra.mxu0 0.0
    %392 = vmatprep.subr.mxu0 0.0
    %393 = vmatpush1.msra.mxu0 0.0
    %394 = vmatprep.subr.mxu0 0.0
    %395 = vmatpush1.msra.mxu0 0.0
    %396 = vmatprep.subr.mxu0 0.0
    %397 = vmatpush1.msra.mxu0 0.0
    %398 = vmatprep.subr.mxu0 0.0
    %399 = vmatpush1.msra.mxu0 0.0
    %400 = vmatprep.subr.mxu0 0.0
    %401 = vmatpush1.msra.mxu0 0.0
    %402 = vmatprep.subr.mxu0 0.0
    %403 = vmatpush1.msra.mxu0 0.0
    %404 = vmatprep.subr.mxu0 0.0
    %405 = vmatpush1.msra.mxu0 0.0
    %406 = vmatprep.subr.mxu0 0.0
    %407 = vmatpush1.msra.mxu0 0.0
    %408 = vmatprep.subr.mxu0 0.0
    %409 = vmatpush1.msra.mxu0 0.0
    %410 = vmatprep.subr.mxu0 0.0
    %411 = vmatpush1.msra.mxu0 0.0
    %412 = vmatprep.subr.mxu0 0.0
    %413 = vmatpush1.msra.mxu0 0.0
    %414 = vmatprep.subr.mxu0 0.0
    %415 = vmatpush1.msra.mxu0 0.0
    %416 = vmatprep.subr.mxu0 0.0
    %417 = vmatpush1.msra.mxu0 0.0
    %418 = vmatprep.subr.mxu0 0.0
    %419 = vmatpush1.msra.mxu0 0.0
    %420 = vmatprep.subr.mxu0 0.0
    %421 = vmatpush1.msra.mxu0 0.0
    %422 = vmatprep.subr.mxu0 0.0
    %423 = vmatpush1.msra.mxu0 0.0
    %424 = vmatprep.subr.mxu0 0.0
    %425 = vmatpush1.msra.mxu0 0.0
    %426 = vmatprep.subr.mxu0 0.0
    %427 = vmatpush1.msra.mxu0 0.0
    %428 = vmatprep.subr.mxu0 0.0
    %429 = vmatpush1.msra.mxu0 0.0
    %430 = vmatprep.subr.mxu0 0.0
    %431 = vmatpush1.msra.mxu0 0.0
    %432 = vmatprep.subr.mxu0 0.0
    %433 = vmatpush1.msra.mxu0 0.0
    %434 = vmatprep.subr.mxu0 0.0
    %435 = vmatpush1.msra.mxu0 0.0
    %436 = vmatprep.subr.mxu0 0.0
    %437 = vmatpush1.msra.mxu0 0.0
    %438 = vmatprep.subr.mxu0 0.0
    %439 = vmatpush1.msra.mxu0 0.0
    %440 = vmatprep.subr.mxu0 0.0
    %441 = vmatpush1.msra.mxu0 0.0
    %442 = vmatprep.subr.mxu0 0.0
    %443 = vmatpush1.msra.mxu0 0.0
    %444 = vmatprep.subr.mxu0 0.0
    %445 = vmatpush1.msra.mxu0 0.0
    %446 = vmatprep.mubr.f32.mxu0 0.0
    %v447 = vand.u32 %v41, 4294901760
    %448 = vmatmul.mubr.f32.gmra.mrb[0].mxu0 %v447
    %v449 = vpop.f32.mrb[0].mxu0
    %v450 = vadd.f32 %v367, %v449
    %v451 = vpop.f32.mrb[0].mxu0
    %452 = vdwg.mxu0
    %453 = vmatprep.subr.mxu0 0.0
    %v454 = vand.u32 %v28, 4294901760
    %455 = vmatpush1.msra.mxu0 %v454
    %456 = vmatprep.subr.mxu0 0.0
    %v457 = vand.u32 %v29, 4294901760
    %458 = vmatpush1.msra.mxu0 %v457
    %459 = vmatprep.subr.mxu0 0.0
    %v460 = vand.u32 %v30, 4294901760
    %461 = vmatpush1.msra.mxu0 %v460
    %462 = vmatprep.subr.mxu0 0.0
    %v463 = vand.u32 %v31, 4294901760
    %464 = vmatpush1.msra.mxu0 %v463
    %465 = vmatprep.subr.mxu0 0.0
    %466 = vmatpush1.msra.mxu0 0.0
    %467 = vmatprep.subr.mxu0 0.0
    %468 = vmatpush1.msra.mxu0 0.0
    %469 = vmatprep.subr.mxu0 0.0
    %470 = vmatpush1.msra.mxu0 0.0
    %471 = vmatprep.subr.mxu0 0.0
    %472 = vmatpush1.msra.mxu0 0.0
    %473 = vmatprep.subr.mxu0 0.0
    %474 = vmatpush1.msra.mxu0 0.0
    %475 = vmatprep.subr.mxu0 0.0
    %476 = vmatpush1.msra.mxu0 0.0
    %477 = vmatprep.subr.mxu0 0.0
    %478 = vmatpush1.msra.mxu0 0.0
    %479 = vmatprep.subr.mxu0 0.0
    %480 = vmatpush1.msra.mxu0 0.0
    %481 = vmatprep.subr.mxu0 0.0
    %482 = vmatpush1.msra.mxu0 0.0
    %483 = vmatprep.subr.mxu0 0.0
    %484 = vmatpush1.msra.mxu0 0.0
    %485 = vmatprep.subr.mxu0 0.0
    %486 = vmatpush1.msra.mxu0 0.0
    %487 = vmatprep.subr.mxu0 0.0
    %488 = vmatpush1.msra.mxu0 0.0
    %489 = vmatprep.subr.mxu0 0.0
    %490 = vmatpush1.msra.mxu0 0.0
    %491 = vmatprep.subr.mxu0 0.0
    %492 = vmatpush1.msra.mxu0 0.0
    %493 = vmatprep.subr.mxu0 0.0
    %494 = vmatpush1.msra.mxu0 0.0
    %495 = vmatprep.subr.mxu0 0.0
    %496 = vmatpush1.msra.mxu0 0.0
    %497 = vmatprep.subr.mxu0 0.0
    %498 = vmatpush1.msra.mxu0 0.0
    %499 = vmatprep.subr.mxu0 0.0
    %500 = vmatpush1.msra.mxu0 0.0
    %501 = vmatprep.subr.mxu0 0.0
    %502 = vmatpush1.msra.mxu0 0.0
    %503 = vmatprep.subr.mxu0 0.0
    %504 = vmatpush1.msra.mxu0 0.0
    %505 = vmatprep.subr.mxu0 0.0
    %506 = vmatpush1.msra.mxu0 0.0
    %507 = vmatprep.subr.mxu0 0.0
    %508 = vmatpush1.msra.mxu0 0.0
    %509 = vmatprep.subr.mxu0 0.0
    %510 = vmatpush1.msra.mxu0 0.0
    %511 = vmatprep.subr.mxu0 0.0
    %512 = vmatpush1.msra.mxu0 0.0
    %513 = vmatprep.subr.mxu0 0.0
    %514 = vmatpush1.msra.mxu0 0.0
    %515 = vmatprep.subr.mxu0 0.0
    %516 = vmatpush1.msra.mxu0 0.0
    %517 = vmatprep.subr.mxu0 0.0
    %518 = vmatpush1.msra.mxu0 0.0
    %519 = vmatprep.subr.mxu0 0.0
    %520 = vmatpush1.msra.mxu0 0.0
    %521 = vmatprep.mubr.f32.mxu0 0.0
    %v522 = vand.u32 %v41, 4294901760
    %523 = vmatmul.mubr.f32.gmra.mrb[0].mxu0 %v522
    %v524 = vpop.f32.mrb[0].mxu0
    %v525 = vadd.f32 %v450, %v524
    %v526 = vpop.f32.mrb[0].mxu0
    %527 = vdwg.mxu0
    %v528 = vmax.f32 %v525, 0.0
    %v529 = vld [vmem:[%s3] sm:$0xff]
    %v530 = vld [vmem:[%s3 + $0x8] sm:$0xff]
    %v531 = vld [vmem:[%s3 + $0x10] sm:$0xff]
    %v532 = vld [vmem:[%s3 + $0x18] sm:$0xff]
    %v533 = vld [vmem:[%s3 + $0x20] sm:$0xff]
    %v534 = vld [vmem:[%s3 + $0x28] sm:$0xff]
    %v535 = vld [vmem:[%s3 + $0x30] sm:$0xff]
    %v536 = vld [vmem:[%s3 + $0x38] sm:$0xff]
    %v537 = vld [vmem:[%s4] sm:$0x1]
    %v539 = vlaneseq
    %v540 = vshrl.u32 %v539, 7
    %v541 = vsub.s32 0, %v540
    %v542 = vrot.slane %v537, %v541
    %vm544 = vcmask 523264
    %v546 = vsel %vm544, %v528, 0
    %548 = vmatprep.subr.mxu0 0.0
    %v549 = vand.u32 %v529, 4294901760
    %550 = vmatpush1.msra.mxu0 %v549
    %551 = vmatprep.subr.mxu0 0.0
    %v552 = vand.u32 %v530, 4294901760
    %553 = vmatpush1.msra.mxu0 %v552
    %554 = vmatprep.subr.mxu0 0.0
    %v555 = vand.u32 %v531, 4294901760
    %556 = vmatpush1.msra.mxu0 %v555
    %557 = vmatprep.subr.mxu0 0.0
    %v558 = vand.u32 %v532, 4294901760
    %559 = vmatpush1.msra.mxu0 %v558
    %560 = vmatprep.subr.mxu0 0.0
    %v561 = vand.u32 %v533, 4294901760
    %562 = vmatpush1.msra.mxu0 %v561
    %563 = vmatprep.subr.mxu0 0.0
    %v564 = vand.u32 %v534, 4294901760
    %565 = vmatpush1.msra.mxu0 %v564
    %566 = vmatprep.subr.mxu0 0.0
    %v567 = vand.u32 %v535, 4294901760
    %568 = vmatpush1.msra.mxu0 %v567
    %569 = vmatprep.subr.mxu0 0.0
    %v570 = vand.u32 %v536, 4294901760
    %571 = vmatpush1.msra.mxu0 %v570
    %572 = vmatprep.subr.mxu0 0.0
    %573 = vmatpush1.msra.mxu0 0.0
    %574 = vmatprep.subr.mxu0 0.0
    %575 = vmatpush1.msra.mxu0 0.0
    %576 = vmatprep.subr.mxu0 0.0
    %577 = vmatpush1.msra.mxu0 0.0
    %578 = vmatprep.subr.mxu0 0.0
    %579 = vmatpush1.msra.mxu0 0.0
    %580 = vmatprep.subr.mxu0 0.0
    %581 = vmatpush1.msra.mxu0 0.0
    %582 = vmatprep.subr.mxu0 0.0
    %583 = vmatpush1.msra.mxu0 0.0
    %584 = vmatprep.subr.mxu0 0.0
    %585 = vmatpush1.msra.mxu0 0.0
    %586 = vmatprep.subr.mxu0 0.0
    %587 = vmatpush1.msra.mxu0 0.0
    %588 = vmatprep.subr.mxu0 0.0
    %589 = vmatpush1.msra.mxu0 0.0
    %590 = vmatprep.subr.mxu0 0.0
    %591 = vmatpush1.msra.mxu0 0.0
    %592 = vmatprep.subr.mxu0 0.0
    %593 = vmatpush1.msra.mxu0 0.0
    %594 = vmatprep.subr.mxu0 0.0
    %595 = vmatpush1.msra.mxu0 0.0
    %596 = vmatprep.subr.mxu0 0.0
    %597 = vmatpush1.msra.mxu0 0.0
    %598 = vmatprep.subr.mxu0 0.0
    %599 = vmatpush1.msra.mxu0 0.0
    %600 = vmatprep.subr.mxu0 0.0
    %601 = vmatpush1.msra.mxu0 0.0
    %602 = vmatprep.subr.mxu0 0.0
    %603 = vmatpush1.msra.mxu0 0.0
    %604 = vmatprep.subr.mxu0 0.0
    %605 = vmatpush1.msra.mxu0 0.0
    %606 = vmatprep.subr.mxu0 0.0
    %607 = vmatpush1.msra.mxu0 0.0
    %608 = vmatprep.subr.mxu0 0.0
    %609 = vmatpush1.msra.mxu0 0.0
    %610 = vmatprep.subr.mxu0 0.0
    %611 = vmatpush1.msra.mxu0 0.0
    %612 = vmatprep.subr.mxu0 0.0
    %613 = vmatpush1.msra.mxu0 0.0
    %614 = vmatprep.subr.mxu0 0.0
    %615 = vmatpush1.msra.mxu0 0.0
    %616 = vmatprep.subr.mxu0 0.0
    %617 = vmatpush1.msra.mxu0 0.0
    %618 = vmatprep.subr.mxu0 0.0
    %619 = vmatpush1.msra.mxu0 0.0
    %620 = vmatprep.mubr.f32.mxu0 0.0
    %v621 = vand.u32 %v546, 4294901760
    %v622 = vsub.f32 %v546, %v621
    %v623 = vand.u32 %v622, 4294901760
    %v624 = vsub.f32 %v622, %v623
    %v625 = vand.u32 %v624, 4294901760
    %626 = vmatmul.mubr.f32.gmra.mrb[0].mxu0 %v625
    %v627 = vpop.f32.mrb[0].mxu0
    %v628 = vadd.f32 %v542, %v627
    %v629 = vpop.f32.mrb[0].mxu0
    %630 = vdwg.mxu0
    %631 = vmatprep.subr.mxu0 0.0
    %v632 = vand.u32 %v529, 4294901760
    %v633 = vsub.f32 %v529, %v632
    %v634 = vand.u32 %v633, 4294901760
    %v635 = vsub.f32 %v633, %v634
    %v636 = vand.u32 %v635, 4294901760
    %637 = vmatpush1.msra.mxu0 %v636
    %638 = vmatprep.subr.mxu0 0.0
    %v639 = vand.u32 %v530, 4294901760
    %v640 = vsub.f32 %v530, %v639
    %v641 = vand.u32 %v640, 4294901760
    %v642 = vsub.f32 %v640, %v641
    %v643 = vand.u32 %v642, 4294901760
    %644 = vmatpush1.msra.mxu0 %v643
    %645 = vmatprep.subr.mxu0 0.0
    %v646 = vand.u32 %v531, 4294901760
    %v647 = vsub.f32 %v531, %v646
    %v648 = vand.u32 %v647, 4294901760
    %v649 = vsub.f32 %v647, %v648
    %v650 = vand.u32 %v649, 4294901760
    %651 = vmatpush1.msra.mxu0 %v650
    %652 = vmatprep.subr.mxu0 0.0
    %v653 = vand.u32 %v532, 4294901760
    %v654 = vsub.f32 %v532, %v653
    %v655 = vand.u32 %v654, 4294901760
    %v656 = vsub.f32 %v654, %v655
    %v657 = vand.u32 %v656, 4294901760
    %658 = vmatpush1.msra.mxu0 %v657
    %659 = vmatprep.subr.mxu0 0.0
    %v660 = vand.u32 %v533, 4294901760
    %v661 = vsub.f32 %v533, %v660
    %v662 = vand.u32 %v661, 4294901760
    %v663 = vsub.f32 %v661, %v662
    %v664 = vand.u32 %v663, 4294901760
    %665 = vmatpush1.msra.mxu0 %v664
    %666 = vmatprep.subr.mxu0 0.0
    %v667 = vand.u32 %v534, 4294901760
    %v668 = vsub.f32 %v534, %v667
    %v669 = vand.u32 %v668, 4294901760
    %v670 = vsub.f32 %v668, %v669
    %v671 = vand.u32 %v670, 4294901760
    %672 = vmatpush1.msra.mxu0 %v671
    %673 = vmatprep.subr.mxu0 0.0
    %v674 = vand.u32 %v535, 4294901760
    %v675 = vsub.f32 %v535, %v674
    %v676 = vand.u32 %v675, 4294901760
    %v677 = vsub.f32 %v675, %v676
    %v678 = vand.u32 %v677, 4294901760
    %679 = vmatpush1.msra.mxu0 %v678
    %680 = vmatprep.subr.mxu0 0.0
    %v681 = vand.u32 %v536, 4294901760
    %v682 = vsub.f32 %v536, %v681
    %v683 = vand.u32 %v682, 4294901760
    %v684 = vsub.f32 %v682, %v683
    %v685 = vand.u32 %v684, 4294901760
    %686 = vmatpush1.msra.mxu0 %v685
    %687 = vmatprep.subr.mxu0 0.0
    %688 = vmatpush1.msra.mxu0 0.0
    %689 = vmatprep.subr.mxu0 0.0
    %690 = vmatpush1.msra.mxu0 0.0
    %691 = vmatprep.subr.mxu0 0.0
    %692 = vmatpush1.msra.mxu0 0.0
    %693 = vmatprep.subr.mxu0 0.0
    %694 = vmatpush1.msra.mxu0 0.0
    %695 = vmatprep.subr.mxu0 0.0
    %696 = vmatpush1.msra.mxu0 0.0
    %697 = vmatprep.subr.mxu0 0.0
    %698 = vmatpush1.msra.mxu0 0.0
    %699 = vmatprep.subr.mxu0 0.0
    %700 = vmatpush1.msra.mxu0 0.0
    %701 = vmatprep.subr.mxu0 0.0
    %702 = vmatpush1.msra.mxu0 0.0
    %703 = vmatprep.subr.mxu0 0.0
    %704 = vmatpush1.msra.mxu0 0.0
    %705 = vmatprep.subr.mxu0 0.0
    %706 = vmatpush1.msra.mxu0 0.0
    %707 = vmatprep.subr.mxu0 0.0
    %708 = vmatpush1.msra.mxu0 0.0
    %709 = vmatprep.subr.mxu0 0.0
    %710 = vmatpush1.msra.mxu0 0.0
    %711 = vmatprep.subr.mxu0 0.0
    %712 = vmatpush1.msra.mxu0 0.0
    %713 = vmatprep.subr.mxu0 0.0
    %714 = vmatpush1.msra.mxu0 0.0
    %715 = vmatprep.subr.mxu0 0.0
    %716 = vmatpush1.msra.mxu0 0.0
    %717 = vmatprep.subr.mxu0 0.0
    %718 = vmatpush1.msra.mxu0 0.0
    %719 = vmatprep.subr.mxu0 0.0
    %720 = vmatpush1.msra.mxu0 0.0
    %721 = vmatprep.subr.mxu0 0.0
    %722 = vmatpush1.msra.mxu0 0.0
    %723 = vmatprep.subr.mxu0 0.0
    %724 = vmatpush1.msra.mxu0 0.0
    %725 = vmatprep.subr.mxu0 0.0
    %726 = vmatpush1.msra.mxu0 0.0
    %727 = vmatprep.subr.mxu0 0.0
    %728 = vmatpush1.msra.mxu0 0.0
    %729 = vmatprep.subr.mxu0 0.0
    %730 = vmatpush1.msra.mxu0 0.0
    %731 = vmatprep.subr.mxu0 0.0
    %732 = vmatpush1.msra.mxu0 0.0
    %733 = vmatprep.subr.mxu0 0.0
    %734 = vmatpush1.msra.mxu0 0.0
    %735 = vmatprep.mubr.f32.mxu0 0.0
    %v736 = vand.u32 %v546, 4294901760
    %737 = vmatmul.mubr.f32.gmra.mrb[0].mxu0 %v736
    %v738 = vpop.f32.mrb[0].mxu0
    %v739 = vadd.f32 %v628, %v738
    %v740 = vpop.f32.mrb[0].mxu0
    %741 = vdwg.mxu0
    %742 = vmatprep.subr.mxu0 0.0
    %v743 = vand.u32 %v529, 4294901760
    %v744 = vsub.f32 %v529, %v743
    %745 = vmatpush1.msra.mxu0 %v744
    %746 = vmatprep.subr.mxu0 0.0
    %v747 = vand.u32 %v530, 4294901760
    %v748 = vsub.f32 %v530, %v747
    %749 = vmatpush1.msra.mxu0 %v748
    %750 = vmatprep.subr.mxu0 0.0
    %v751 = vand.u32 %v531, 4294901760
    %v752 = vsub.f32 %v531, %v751
    %753 = vmatpush1.msra.mxu0 %v752
    %754 = vmatprep.subr.mxu0 0.0
    %v755 = vand.u32 %v532, 4294901760
    %v756 = vsub.f32 %v532, %v755
    %757 = vmatpush1.msra.mxu0 %v756
    %758 = vmatprep.subr.mxu0 0.0
    %v759 = vand.u32 %v533, 4294901760
    %v760 = vsub.f32 %v533, %v759
    %761 = vmatpush1.msra.mxu0 %v760
    %762 = vmatprep.subr.mxu0 0.0
    %v763 = vand.u32 %v534, 4294901760
    %v764 = vsub.f32 %v534, %v763
    %765 = vmatpush1.msra.mxu0 %v764
    %766 = vmatprep.subr.mxu0 0.0
    %v767 = vand.u32 %v535, 4294901760
    %v768 = vsub.f32 %v535, %v767
    %769 = vmatpush1.msra.mxu0 %v768
    %770 = vmatprep.subr.mxu0 0.0
    %v771 = vand.u32 %v536, 4294901760
    %v772 = vsub.f32 %v536, %v771
    %773 = vmatpush1.msra.mxu0 %v772
    %774 = vmatprep.subr.mxu0 0.0
    %775 = vmatpush1.msra.mxu0 0.0
    %776 = vmatprep.subr.mxu0 0.0
    %777 = vmatpush1.msra.mxu0 0.0
    %778 = vmatprep.subr.mxu0 0.0
    %779 = vmatpush1.msra.mxu0 0.0
    %780 = vmatprep.subr.mxu0 0.0
    %781 = vmatpush1.msra.mxu0 0.0
    %782 = vmatprep.subr.mxu0 0.0
    %783 = vmatpush1.msra.mxu0 0.0
    %784 = vmatprep.subr.mxu0 0.0
    %785 = vmatpush1.msra.mxu0 0.0
    %786 = vmatprep.subr.mxu0 0.0
    %787 = vmatpush1.msra.mxu0 0.0
    %788 = vmatprep.subr.mxu0 0.0
    %789 = vmatpush1.msra.mxu0 0.0
    %790 = vmatprep.subr.mxu0 0.0
    %791 = vmatpush1.msra.mxu0 0.0
    %792 = vmatprep.subr.mxu0 0.0
    %793 = vmatpush1.msra.mxu0 0.0
    %794 = vmatprep.subr.mxu0 0.0
    %795 = vmatpush1.msra.mxu0 0.0
    %796 = vmatprep.subr.mxu0 0.0
    %797 = vmatpush1.msra.mxu0 0.0
    %798 = vmatprep.subr.mxu0 0.0
    %799 = vmatpush1.msra.mxu0 0.0
    %800 = vmatprep.subr.mxu0 0.0
    %801 = vmatpush1.msra.mxu0 0.0
    %802 = vmatprep.subr.mxu0 0.0
    %803 = vmatpush1.msra.mxu0 0.0
    %804 = vmatprep.subr.mxu0 0.0
    %805 = vmatpush1.msra.mxu0 0.0
    %806 = vmatprep.subr.mxu0 0.0
    %807 = vmatpush1.msra.mxu0 0.0
    %808 = vmatprep.subr.mxu0 0.0
    %809 = vmatpush1.msra.mxu0 0.0
    %810 = vmatprep.subr.mxu0 0.0
    %811 = vmatpush1.msra.mxu0 0.0
    %812 = vmatprep.subr.mxu0 0.0
    %813 = vmatpush1.msra.mxu0 0.0
    %814 = vmatprep.subr.mxu0 0.0
    %815 = vmatpush1.msra.mxu0 0.0
    %816 = vmatprep.subr.mxu0 0.0
    %817 = vmatpush1.msra.mxu0 0.0
    %818 = vmatprep.subr.mxu0 0.0
    %819 = vmatpush1.msra.mxu0 0.0
    %820 = vmatprep.subr.mxu0 0.0
    %821 = vmatpush1.msra.mxu0 0.0
    %822 = vmatprep.mubr.f32.mxu0 0.0
    %v823 = vand.u32 %v546, 4294901760
    %v824 = vsub.f32 %v546, %v823
    %825 = vmatmul.mubr.f32.gmra.mrb[0].mxu0 %v824
    %v826 = vpop.f32.mrb[0].mxu0
    %v827 = vadd.f32 %v739, %v826
    %v828 = vpop.f32.mrb[0].mxu0
    %829 = vdwg.mxu0
    %830 = vmatprep.subr.mxu0 0.0
    %v831 = vand.u32 %v529, 4294901760
    %832 = vmatpush1.msra.mxu0 %v831
    %833 = vmatprep.subr.mxu0 0.0
    %v834 = vand.u32 %v530, 4294901760
    %835 = vmatpush1.msra.mxu0 %v834
    %836 = vmatprep.subr.mxu0 0.0
    %v837 = vand.u32 %v531, 4294901760
    %838 = vmatpush1.msra.mxu0 %v837
    %839 = vmatprep.subr.mxu0 0.0
    %v840 = vand.u32 %v532, 4294901760
    %841 = vmatpush1.msra.mxu0 %v840
    %842 = vmatprep.subr.mxu0 0.0
    %v843 = vand.u32 %v533, 4294901760
    %844 = vmatpush1.msra.mxu0 %v843
    %845 = vmatprep.subr.mxu0 0.0
    %v846 = vand.u32 %v534, 4294901760
    %847 = vmatpush1.msra.mxu0 %v846
    %848 = vmatprep.subr.mxu0 0.0
    %v849 = vand.u32 %v535, 4294901760
    %850 = vmatpush1.msra.mxu0 %v849
    %851 = vmatprep.subr.mxu0 0.0
    %v852 = vand.u32 %v536, 4294901760
    %853 = vmatpush1.msra.mxu0 %v852
    %854 = vmatprep.subr.mxu0 0.0
    %855 = vmatpush1.msra.mxu0 0.0
    %856 = vmatprep.subr.mxu0 0.0
    %857 = vmatpush1.msra.mxu0 0.0
    %858 = vmatprep.subr.mxu0 0.0
    %859 = vmatpush1.msra.mxu0 0.0
    %860 = vmatprep.subr.mxu0 0.0
    %861 = vmatpush1.msra.mxu0 0.0
    %862 = vmatprep.subr.mxu0 0.0
    %863 = vmatpush1.msra.mxu0 0.0
    %864 = vmatprep.subr.mxu0 0.0
    %865 = vmatpush1.msra.mxu0 0.0
    %866 = vmatprep.subr.mxu0 0.0
    %867 = vmatpush1.msra.mxu0 0.0
    %868 = vmatprep.subr.mxu0 0.0
    %869 = vmatpush1.msra.mxu0 0.0
    %870 = vmatprep.subr.mxu0 0.0
    %871 = vmatpush1.msra.mxu0 0.0
    %872 = vmatprep.subr.mxu0 0.0
    %873 = vmatpush1.msra.mxu0 0.0
    %874 = vmatprep.subr.mxu0 0.0
    %875 = vmatpush1.msra.mxu0 0.0
    %876 = vmatprep.subr.mxu0 0.0
    %877 = vmatpush1.msra.mxu0 0.0
    %878 = vmatprep.subr.mxu0 0.0
    %879 = vmatpush1.msra.mxu0 0.0
    %880 = vmatprep.subr.mxu0 0.0
    %881 = vmatpush1.msra.mxu0 0.0
    %882 = vmatprep.subr.mxu0 0.0
    %883 = vmatpush1.msra.mxu0 0.0
    %884 = vmatprep.subr.mxu0 0.0
    %885 = vmatpush1.msra.mxu0 0.0
    %886 = vmatprep.subr.mxu0 0.0
    %887 = vmatpush1.msra.mxu0 0.0
    %888 = vmatprep.subr.mxu0 0.0
    %889 = vmatpush1.msra.mxu0 0.0
    %890 = vmatprep.subr.mxu0 0.0
    %891 = vmatpush1.msra.mxu0 0.0
    %892 = vmatprep.subr.mxu0 0.0
    %893 = vmatpush1.msra.mxu0 0.0
    %894 = vmatprep.subr.mxu0 0.0
    %895 = vmatpush1.msra.mxu0 0.0
    %896 = vmatprep.subr.mxu0 0.0
    %897 = vmatpush1.msra.mxu0 0.0
    %898 = vmatprep.subr.mxu0 0.0
    %899 = vmatpush1.msra.mxu0 0.0
    %900 = vmatprep.subr.mxu0 0.0
    %901 = vmatpush1.msra.mxu0 0.0
    %902 = vmatprep.mubr.f32.mxu0 0.0
    %v903 = vand.u32 %v546, 4294901760
    %v904 = vsub.f32 %v546, %v903
    %v905 = vand.u32 %v904, 4294901760
    %906 = vmatmul.mubr.f32.gmra.mrb[0].mxu0 %v905
    %v907 = vpop.f32.mrb[0].mxu0
    %v908 = vadd.f32 %v827, %v907
    %v909 = vpop.f32.mrb[0].mxu0
    %910 = vdwg.mxu0
    %911 = vmatprep.subr.mxu0 0.0
    %v912 = vand.u32 %v529, 4294901760
    %v913 = vsub.f32 %v529, %v912
    %v914 = vand.u32 %v913, 4294901760
    %915 = vmatpush1.msra.mxu0 %v914
    %916 = vmatprep.subr.mxu0 0.0
    %v917 = vand.u32 %v530, 4294901760
    %v918 = vsub.f32 %v530, %v917
    %v919 = vand.u32 %v918, 4294901760
    %920 = vmatpush1.msra.mxu0 %v919
    %921 = vmatprep.subr.mxu0 0.0
    %v922 = vand.u32 %v531, 4294901760
    %v923 = vsub.f32 %v531, %v922
    %v924 = vand.u32 %v923, 4294901760
    %925 = vmatpush1.msra.mxu0 %v924
    %926 = vmatprep.subr.mxu0 0.0
    %v927 = vand.u32 %v532, 4294901760
    %v928 = vsub.f32 %v532, %v927
    %v929 = vand.u32 %v928, 4294901760
    %930 = vmatpush1.msra.mxu0 %v929
    %931 = vmatprep.subr.mxu0 0.0
    %v932 = vand.u32 %v533, 4294901760
    %v933 = vsub.f32 %v533, %v932
    %v934 = vand.u32 %v933, 4294901760
    %935 = vmatpush1.msra.mxu0 %v934
    %936 = vmatprep.subr.mxu0 0.0
    %v937 = vand.u32 %v534, 4294901760
    %v938 = vsub.f32 %v534, %v937
    %v939 = vand.u32 %v938, 4294901760
    %940 = vmatpush1.msra.mxu0 %v939
    %941 = vmatprep.subr.mxu0 0.0
    %v942 = vand.u32 %v535, 4294901760
    %v943 = vsub.f32 %v535, %v942
    %v944 = vand.u32 %v943, 4294901760
    %945 = vmatpush1.msra.mxu0 %v944
    %946 = vmatprep.subr.mxu0 0.0
    %v947 = vand.u32 %v536, 4294901760
    %v948 = vsub.f32 %v536, %v947
    %v949 = vand.u32 %v948, 4294901760
    %950 = vmatpush1.msra.mxu0 %v949
    %951 = vmatprep.subr.mxu0 0.0
    %952 = vmatpush1.msra.mxu0 0.0
    %953 = vmatprep.subr.mxu0 0.0
    %954 = vmatpush1.msra.mxu0 0.0
    %955 = vmatprep.subr.mxu0 0.0
    %956 = vmatpush1.msra.mxu0 0.0
    %957 = vmatprep.subr.mxu0 0.0
    %958 = vmatpush1.msra.mxu0 0.0
    %959 = vmatprep.subr.mxu0 0.0
    %960 = vmatpush1.msra.mxu0 0.0
    %961 = vmatprep.subr.mxu0 0.0
    %962 = vmatpush1.msra.mxu0 0.0
    %963 = vmatprep.subr.mxu0 0.0
    %964 = vmatpush1.msra.mxu0 0.0
    %965 = vmatprep.subr.mxu0 0.0
    %966 = vmatpush1.msra.mxu0 0.0
    %967 = vmatprep.subr.mxu0 0.0
    %968 = vmatpush1.msra.mxu0 0.0
    %969 = vmatprep.subr.mxu0 0.0
    %970 = vmatpush1.msra.mxu0 0.0
    %971 = vmatprep.subr.mxu0 0.0
    %972 = vmatpush1.msra.mxu0 0.0
    %973 = vmatprep.subr.mxu0 0.0
    %974 = vmatpush1.msra.mxu0 0.0
    %975 = vmatprep.subr.mxu0 0.0
    %976 = vmatpush1.msra.mxu0 0.0
    %977 = vmatprep.subr.mxu0 0.0
    %978 = vmatpush1.msra.mxu0 0.0
    %979 = vmatprep.subr.mxu0 0.0
    %980 = vmatpush1.msra.mxu0 0.0
    %981 = vmatprep.subr.mxu0 0.0
    %982 = vmatpush1.msra.mxu0 0.0
    %983 = vmatprep.subr.mxu0 0.0
    %984 = vmatpush1.msra.mxu0 0.0
    %985 = vmatprep.subr.mxu0 0.0
    %986 = vmatpush1.msra.mxu0 0.0
    %987 = vmatprep.subr.mxu0 0.0
    %988 = vmatpush1.msra.mxu0 0.0
    %989 = vmatprep.subr.mxu0 0.0
    %990 = vmatpush1.msra.mxu0 0.0
    %991 = vmatprep.subr.mxu0 0.0
    %992 = vmatpush1.msra.mxu0 0.0
    %993 = vmatprep.subr.mxu0 0.0
    %994 = vmatpush1.msra.mxu0 0.0
    %995 = vmatprep.subr.mxu0 0.0
    %996 = vmatpush1.msra.mxu0 0.0
    %997 = vmatprep.subr.mxu0 0.0
    %998 = vmatpush1.msra.mxu0 0.0
    %999 = vmatprep.mubr.f32.mxu0 0.0
    %v1000 = vand.u32 %v546, 4294901760
    %1001 = vmatmul.mubr.f32.gmra.mrb[0].mxu0 %v1000
    %v1002 = vpop.f32.mrb[0].mxu0
    %v1003 = vadd.f32 %v908, %v1002
    %v1004 = vpop.f32.mrb[0].mxu0
    %1005 = vdwg.mxu0
    %1006 = vmatprep.subr.mxu0 0.0
    %v1007 = vand.u32 %v529, 4294901760
    %1008 = vmatpush1.msra.mxu0 %v1007
    %1009 = vmatprep.subr.mxu0 0.0
    %v1010 = vand.u32 %v530, 4294901760
    %1011 = vmatpush1.msra.mxu0 %v1010
    %1012 = vmatprep.subr.mxu0 0.0
    %v1013 = vand.u32 %v531, 4294901760
    %1014 = vmatpush1.msra.mxu0 %v1013
    %1015 = vmatprep.subr.mxu0 0.0
    %v1016 = vand.u32 %v532, 4294901760
    %1017 = vmatpush1.msra.mxu0 %v1016
    %1018 = vmatprep.subr.mxu0 0.0
    %v1019 = vand.u32 %v533, 4294901760
    %1020 = vmatpush1.msra.mxu0 %v1019
    %1021 = vmatprep.subr.mxu0 0.0
    %v1022 = vand.u32 %v534, 4294901760
    %1023 = vmatpush1.msra.mxu0 %v1022
    %1024 = vmatprep.subr.mxu0 0.0
    %v1025 = vand.u32 %v535, 4294901760
    %1026 = vmatpush1.msra.mxu0 %v1025
    %1027 = vmatprep.subr.mxu0 0.0
    %v1028 = vand.u32 %v536, 4294901760
    %1029 = vmatpush1.msra.mxu0 %v1028
    %1030 = vmatprep.subr.mxu0 0.0
    %1031 = vmatpush1.msra.mxu0 0.0
    %1032 = vmatprep.subr.mxu0 0.0
    %1033 = vmatpush1.msra.mxu0 0.0
    %1034 = vmatprep.subr.mxu0 0.0
    %1035 = vmatpush1.msra.mxu0 0.0
    %1036 = vmatprep.subr.mxu0 0.0
    %1037 = vmatpush1.msra.mxu0 0.0
    %1038 = vmatprep.subr.mxu0 0.0
    %1039 = vmatpush1.msra.mxu0 0.0
    %1040 = vmatprep.subr.mxu0 0.0
    %1041 = vmatpush1.msra.mxu0 0.0
    %1042 = vmatprep.subr.mxu0 0.0
    %1043 = vmatpush1.msra.mxu0 0.0
    %1044 = vmatprep.subr.mxu0 0.0
    %1045 = vmatpush1.msra.mxu0 0.0
    %1046 = vmatprep.subr.mxu0 0.0
    %1047 = vmatpush1.msra.mxu0 0.0
    %1048 = vmatprep.subr.mxu0 0.0
    %1049 = vmatpush1.msra.mxu0 0.0
    %1050 = vmatprep.subr.mxu0 0.0
    %1051 = vmatpush1.msra.mxu0 0.0
    %1052 = vmatprep.subr.mxu0 0.0
    %1053 = vmatpush1.msra.mxu0 0.0
    %1054 = vmatprep.subr.mxu0 0.0
    %1055 = vmatpush1.msra.mxu0 0.0
    %1056 = vmatprep.subr.mxu0 0.0
    %1057 = vmatpush1.msra.mxu0 0.0
    %1058 = vmatprep.subr.mxu0 0.0
    %1059 = vmatpush1.msra.mxu0 0.0
    %1060 = vmatprep.subr.mxu0 0.0
    %1061 = vmatpush1.msra.mxu0 0.0
    %1062 = vmatprep.subr.mxu0 0.0
    %1063 = vmatpush1.msra.mxu0 0.0
    %1064 = vmatprep.subr.mxu0 0.0
    %1065 = vmatpush1.msra.mxu0 0.0
    %1066 = vmatprep.subr.mxu0 0.0
    %1067 = vmatpush1.msra.mxu0 0.0
    %1068 = vmatprep.subr.mxu0 0.0
    %1069 = vmatpush1.msra.mxu0 0.0
    %1070 = vmatprep.subr.mxu0 0.0
    %1071 = vmatpush1.msra.mxu0 0.0
    %1072 = vmatprep.subr.mxu0 0.0
    %1073 = vmatpush1.msra.mxu0 0.0
    %1074 = vmatprep.subr.mxu0 0.0
    %1075 = vmatpush1.msra.mxu0 0.0
    %1076 = vmatprep.subr.mxu0 0.0
    %1077 = vmatpush1.msra.mxu0 0.0
    %1078 = vmatprep.mubr.f32.mxu0 0.0
    %v1079 = vand.u32 %v546, 4294901760
    %1080 = vmatmul.mubr.f32.gmra.mrb[0].mxu0 %v1079
    %v1081 = vpop.f32.mrb[0].mxu0
    %v1082 = vadd.f32 %v1003, %v1081
    %v1083 = vpop.f32.mrb[0].mxu0
    %1084 = vdwg.mxu0
    %v1085 = vmax.f32 %v1082, 0.0
    %v1086 = vld [vmem:[%s5] sm:$0xff]
    %v1087 = vld [vmem:[%s5 + $0x8] sm:$0xff]
    %v1088 = vld [vmem:[%s5 + $0x10] sm:$0xff]
    %v1089 = vld [vmem:[%s5 + $0x18] sm:$0xff]
    %v1090 = vld [vmem:[%s6] sm:$0x1]
    %v1092 = vlaneseq
    %v1093 = vshrl.u32 %v1092, 7
    %v1094 = vsub.s32 0, %v1093
    %v1095 = vrot.slane %v1090, %v1094
    %v1098 = vsel %vm39, %v1085, 0
    %1100 = vmatprep.subr.mxu0 0.0
    %v1101 = vand.u32 %v1086, 4294901760
    %1102 = vmatpush1.msra.mxu0 %v1101
    %1103 = vmatprep.subr.mxu0 0.0
    %v1104 = vand.u32 %v1087, 4294901760
    %1105 = vmatpush1.msra.mxu0 %v1104
    %1106 = vmatprep.subr.mxu0 0.0
    %v1107 = vand.u32 %v1088, 4294901760
    %1108 = vmatpush1.msra.mxu0 %v1107
    %1109 = vmatprep.subr.mxu0 0.0
    %v1110 = vand.u32 %v1089, 4294901760
    %1111 = vmatpush1.msra.mxu0 %v1110
    %1112 = vmatprep.subr.mxu0 0.0
    %1113 = vmatpush1.msra.mxu0 0.0
    %1114 = vmatprep.subr.mxu0 0.0
    %1115 = vmatpush1.msra.mxu0 0.0
    %1116 = vmatprep.subr.mxu0 0.0
    %1117 = vmatpush1.msra.mxu0 0.0
    %1118 = vmatprep.subr.mxu0 0.0
    %1119 = vmatpush1.msra.mxu0 0.0
    %1120 = vmatprep.subr.mxu0 0.0
    %1121 = vmatpush1.msra.mxu0 0.0
    %1122 = vmatprep.subr.mxu0 0.0
    %1123 = vmatpush1.msra.mxu0 0.0
    %1124 = vmatprep.subr.mxu0 0.0
    %1125 = vmatpush1.msra.mxu0 0.0
    %1126 = vmatprep.subr.mxu0 0.0
    %1127 = vmatpush1.msra.mxu0 0.0
    %1128 = vmatprep.subr.mxu0 0.0
    %1129 = vmatpush1.msra.mxu0 0.0
    %1130 = vmatprep.subr.mxu0 0.0
    %1131 = vmatpush1.msra.mxu0 0.0
    %1132 = vmatprep.subr.mxu0 0.0
    %1133 = vmatpush1.msra.mxu0 0.0
    %1134 = vmatprep.subr.mxu0 0.0
    %1135 = vmatpush1.msra.mxu0 0.0
    %1136 = vmatprep.subr.mxu0 0.0
    %1137 = vmatpush1.msra.mxu0 0.0
    %1138 = vmatprep.subr.mxu0 0.0
    %1139 = vmatpush1.msra.mxu0 0.0
    %1140 = vmatprep.subr.mxu0 0.0
    %1141 = vmatpush1.msra.mxu0 0.0
    %1142 = vmatprep.subr.mxu0 0.0
    %1143 = vmatpush1.msra.mxu0 0.0
    %1144 = vmatprep.subr.mxu0 0.0
    %1145 = vmatpush1.msra.mxu0 0.0
    %1146 = vmatprep.subr.mxu0 0.0
    %1147 = vmatpush1.msra.mxu0 0.0
    %1148 = vmatprep.subr.mxu0 0.0
    %1149 = vmatpush1.msra.mxu0 0.0
    %1150 = vmatprep.subr.mxu0 0.0
    %1151 = vmatpush1.msra.mxu0 0.0
    %1152 = vmatprep.subr.mxu0 0.0
    %1153 = vmatpush1.msra.mxu0 0.0
    %1154 = vmatprep.subr.mxu0 0.0
    %1155 = vmatpush1.msra.mxu0 0.0
    %1156 = vmatprep.subr.mxu0 0.0
    %1157 = vmatpush1.msra.mxu0 0.0
    %1158 = vmatprep.subr.mxu0 0.0
    %1159 = vmatpush1.msra.mxu0 0.0
    %1160 = vmatprep.subr.mxu0 0.0
    %1161 = vmatpush1.msra.mxu0 0.0
    %1162 = vmatprep.subr.mxu0 0.0
    %1163 = vmatpush1.msra.mxu0 0.0
    %1164 = vmatprep.subr.mxu0 0.0
    %1165 = vmatpush1.msra.mxu0 0.0
    %1166 = vmatprep.subr.mxu0 0.0
    %1167 = vmatpush1.msra.mxu0 0.0
    %1168 = vmatprep.mubr.f32.mxu0 0.0
    %v1169 = vand.u32 %v1098, 4294901760
    %v1170 = vsub.f32 %v1098, %v1169
    %v1171 = vand.u32 %v1170, 4294901760
    %v1172 = vsub.f32 %v1170, %v1171
    %v1173 = vand.u32 %v1172, 4294901760
    %1174 = vmatmul.mubr.f32.gmra.mrb[0].mxu0 %v1173
    %v1175 = vpop.f32.mrb[0].mxu0
    %v1176 = vadd.f32 %v1095, %v1175
    %v1177 = vpop.f32.mrb[0].mxu0
    %1178 = vdwg.mxu0
    %1179 = vmatprep.subr.mxu0 0.0
    %v1180 = vand.u32 %v1086, 4294901760
    %v1181 = vsub.f32 %v1086, %v1180
    %v1182 = vand.u32 %v1181, 4294901760
    %v1183 = vsub.f32 %v1181, %v1182
    %v1184 = vand.u32 %v1183, 4294901760
    %1185 = vmatpush1.msra.mxu0 %v1184
    %1186 = vmatprep.subr.mxu0 0.0
    %v1187 = vand.u32 %v1087, 4294901760
    %v1188 = vsub.f32 %v1087, %v1187
    %v1189 = vand.u32 %v1188, 4294901760
    %v1190 = vsub.f32 %v1188, %v1189
    %v1191 = vand.u32 %v1190, 4294901760
    %1192 = vmatpush1.msra.mxu0 %v1191
    %1193 = vmatprep.subr.mxu0 0.0
    %v1194 = vand.u32 %v1088, 4294901760
    %v1195 = vsub.f32 %v1088, %v1194
    %v1196 = vand.u32 %v1195, 4294901760
    %v1197 = vsub.f32 %v1195, %v1196
    %v1198 = vand.u32 %v1197, 4294901760
    %1199 = vmatpush1.msra.mxu0 %v1198
    %1200 = vmatprep.subr.mxu0 0.0
    %v1201 = vand.u32 %v1089, 4294901760
    %v1202 = vsub.f32 %v1089, %v1201
    %v1203 = vand.u32 %v1202, 4294901760
    %v1204 = vsub.f32 %v1202, %v1203
    %v1205 = vand.u32 %v1204, 4294901760
    %1206 = vmatpush1.msra.mxu0 %v1205
    %1207 = vmatprep.subr.mxu0 0.0
    %1208 = vmatpush1.msra.mxu0 0.0
    %1209 = vmatprep.subr.mxu0 0.0
    %1210 = vmatpush1.msra.mxu0 0.0
    %1211 = vmatprep.subr.mxu0 0.0
    %1212 = vmatpush1.msra.mxu0 0.0
    %1213 = vmatprep.subr.mxu0 0.0
    %1214 = vmatpush1.msra.mxu0 0.0
    %1215 = vmatprep.subr.mxu0 0.0
    %1216 = vmatpush1.msra.mxu0 0.0
    %1217 = vmatprep.subr.mxu0 0.0
    %1218 = vmatpush1.msra.mxu0 0.0
    %1219 = vmatprep.subr.mxu0 0.0
    %1220 = vmatpush1.msra.mxu0 0.0
    %1221 = vmatprep.subr.mxu0 0.0
    %1222 = vmatpush1.msra.mxu0 0.0
    %1223 = vmatprep.subr.mxu0 0.0
    %1224 = vmatpush1.msra.mxu0 0.0
    %1225 = vmatprep.subr.mxu0 0.0
    %1226 = vmatpush1.msra.mxu0 0.0
    %1227 = vmatprep.subr.mxu0 0.0
    %1228 = vmatpush1.msra.mxu0 0.0
    %1229 = vmatprep.subr.mxu0 0.0
    %1230 = vmatpush1.msra.mxu0 0.0
    %1231 = vmatprep.subr.mxu0 0.0
    %1232 = vmatpush1.msra.mxu0 0.0
    %1233 = vmatprep.subr.mxu0 0.0
    %1234 = vmatpush1.msra.mxu0 0.0
    %1235 = vmatprep.subr.mxu0 0.0
    %1236 = vmatpush1.msra.mxu0 0.0
    %1237 = vmatprep.subr.mxu0 0.0
    %1238 = vmatpush1.msra.mxu0 0.0
    %1239 = vmatprep.subr.mxu0 0.0
    %1240 = vmatpush1.msra.mxu0 0.0
    %1241 = vmatprep.subr.mxu0 0.0
    %1242 = vmatpush1.msra.mxu0 0.0
    %1243 = vmatprep.subr.mxu0 0.0
    %1244 = vmatpush1.msra.mxu0 0.0
    %1245 = vmatprep.subr.mxu0 0.0
    %1246 = vmatpush1.msra.mxu0 0.0
    %1247 = vmatprep.subr.mxu0 0.0
    %1248 = vmatpush1.msra.mxu0 0.0
    %1249 = vmatprep.subr.mxu0 0.0
    %1250 = vmatpush1.msra.mxu0 0.0
    %1251 = vmatprep.subr.mxu0 0.0
    %1252 = vmatpush1.msra.mxu0 0.0
    %1253 = vmatprep.subr.mxu0 0.0
    %1254 = vmatpush1.msra.mxu0 0.0
    %1255 = vmatprep.subr.mxu0 0.0
    %1256 = vmatpush1.msra.mxu0 0.0
    %1257 = vmatprep.subr.mxu0 0.0
    %1258 = vmatpush1.msra.mxu0 0.0
    %1259 = vmatprep.subr.mxu0 0.0
    %1260 = vmatpush1.msra.mxu0 0.0
    %1261 = vmatprep.subr.mxu0 0.0
    %1262 = vmatpush1.msra.mxu0 0.0
    %1263 = vmatprep.mubr.f32.mxu0 0.0
    %v1264 = vand.u32 %v1098, 4294901760
    %1265 = vmatmul.mubr.f32.gmra.mrb[0].mxu0 %v1264
    %v1266 = vpop.f32.mrb[0].mxu0
    %v1267 = vadd.f32 %v1176, %v1266
    %v1268 = vpop.f32.mrb[0].mxu0
    %1269 = vdwg.mxu0
    %1270 = vmatprep.subr.mxu0 0.0
    %v1271 = vand.u32 %v1086, 4294901760
    %v1272 = vsub.f32 %v1086, %v1271
    %1273 = vmatpush1.msra.mxu0 %v1272
    %1274 = vmatprep.subr.mxu0 0.0
    %v1275 = vand.u32 %v1087, 4294901760
    %v1276 = vsub.f32 %v1087, %v1275
    %1277 = vmatpush1.msra.mxu0 %v1276
    %1278 = vmatprep.subr.mxu0 0.0
    %v1279 = vand.u32 %v1088, 4294901760
    %v1280 = vsub.f32 %v1088, %v1279
    %1281 = vmatpush1.msra.mxu0 %v1280
    %1282 = vmatprep.subr.mxu0 0.0
    %v1283 = vand.u32 %v1089, 4294901760
    %v1284 = vsub.f32 %v1089, %v1283
    %1285 = vmatpush1.msra.mxu0 %v1284
    %1286 = vmatprep.subr.mxu0 0.0
    %1287 = vmatpush1.msra.mxu0 0.0
    %1288 = vmatprep.subr.mxu0 0.0
    %1289 = vmatpush1.msra.mxu0 0.0
    %1290 = vmatprep.subr.mxu0 0.0
    %1291 = vmatpush1.msra.mxu0 0.0
    %1292 = vmatprep.subr.mxu0 0.0
    %1293 = vmatpush1.msra.mxu0 0.0
    %1294 = vmatprep.subr.mxu0 0.0
    %1295 = vmatpush1.msra.mxu0 0.0
    %1296 = vmatprep.subr.mxu0 0.0
    %1297 = vmatpush1.msra.mxu0 0.0
    %1298 = vmatprep.subr.mxu0 0.0
    %1299 = vmatpush1.msra.mxu0 0.0
    %1300 = vmatprep.subr.mxu0 0.0
    %1301 = vmatpush1.msra.mxu0 0.0
    %1302 = vmatprep.subr.mxu0 0.0
    %1303 = vmatpush1.msra.mxu0 0.0
    %1304 = vmatprep.subr.mxu0 0.0
    %1305 = vmatpush1.msra.mxu0 0.0
    %1306 = vmatprep.subr.mxu0 0.0
    %1307 = vmatpush1.msra.mxu0 0.0
    %1308 = vmatprep.subr.mxu0 0.0
    %1309 = vmatpush1.msra.mxu0 0.0
    %1310 = vmatprep.subr.mxu0 0.0
    %1311 = vmatpush1.msra.mxu0 0.0
    %1312 = vmatprep.subr.mxu0 0.0
    %1313 = vmatpush1.msra.mxu0 0.0
    %1314 = vmatprep.subr.mxu0 0.0
    %1315 = vmatpush1.msra.mxu0 0.0
    %1316 = vmatprep.subr.mxu0 0.0
    %1317 = vmatpush1.msra.mxu0 0.0
    %1318 = vmatprep.subr.mxu0 0.0
    %1319 = vmatpush1.msra.mxu0 0.0
    %1320 = vmatprep.subr.mxu0 0.0
    %1321 = vmatpush1.msra.mxu0 0.0
    %1322 = vmatprep.subr.mxu0 0.0
    %1323 = vmatpush1.msra.mxu0 0.0
    %1324 = vmatprep.subr.mxu0 0.0
    %1325 = vmatpush1.msra.mxu0 0.0
    %1326 = vmatprep.subr.mxu0 0.0
    %1327 = vmatpush1.msra.mxu0 0.0
    %1328 = vmatprep.subr.mxu0 0.0
    %1329 = vmatpush1.msra.mxu0 0.0
    %1330 = vmatprep.subr.mxu0 0.0
    %1331 = vmatpush1.msra.mxu0 0.0
    %1332 = vmatprep.subr.mxu0 0.0
    %1333 = vmatpush1.msra.mxu0 0.0
    %1334 = vmatprep.subr.mxu0 0.0
    %1335 = vmatpush1.msra.mxu0 0.0
    %1336 = vmatprep.subr.mxu0 0.0
    %1337 = vmatpush1.msra.mxu0 0.0
    %1338 = vmatprep.subr.mxu0 0.0
    %1339 = vmatpush1.msra.mxu0 0.0
    %1340 = vmatprep.subr.mxu0 0.0
    %1341 = vmatpush1.msra.mxu0 0.0
    %1342 = vmatprep.mubr.f32.mxu0 0.0
    %v1343 = vand.u32 %v1098, 4294901760
    %v1344 = vsub.f32 %v1098, %v1343
    %1345 = vmatmul.mubr.f32.gmra.mrb[0].mxu0 %v1344
    %v1346 = vpop.f32.mrb[0].mxu0
    %v1347 = vadd.f32 %v1267, %v1346
    %v1348 = vpop.f32.mrb[0].mxu0
    %1349 = vdwg.mxu0
    %1350 = vmatprep.subr.mxu0 0.0
    %v1351 = vand.u32 %v1086, 4294901760
    %1352 = vmatpush1.msra.mxu0 %v1351
    %1353 = vmatprep.subr.mxu0 0.0
    %v1354 = vand.u32 %v1087, 4294901760
    %1355 = vmatpush1.msra.mxu0 %v1354
    %1356 = vmatprep.subr.mxu0 0.0
    %v1357 = vand.u32 %v1088, 4294901760
    %1358 = vmatpush1.msra.mxu0 %v1357
    %1359 = vmatprep.subr.mxu0 0.0
    %v1360 = vand.u32 %v1089, 4294901760
    %1361 = vmatpush1.msra.mxu0 %v1360
    %1362 = vmatprep.subr.mxu0 0.0
    %1363 = vmatpush1.msra.mxu0 0.0
    %1364 = vmatprep.subr.mxu0 0.0
    %1365 = vmatpush1.msra.mxu0 0.0
    %1366 = vmatprep.subr.mxu0 0.0
    %1367 = vmatpush1.msra.mxu0 0.0
    %1368 = vmatprep.subr.mxu0 0.0
    %1369 = vmatpush1.msra.mxu0 0.0
    %1370 = vmatprep.subr.mxu0 0.0
    %1371 = vmatpush1.msra.mxu0 0.0
    %1372 = vmatprep.subr.mxu0 0.0
    %1373 = vmatpush1.msra.mxu0 0.0
    %1374 = vmatprep.subr.mxu0 0.0
    %1375 = vmatpush1.msra.mxu0 0.0
    %1376 = vmatprep.subr.mxu0 0.0
    %1377 = vmatpush1.msra.mxu0 0.0
    %1378 = vmatprep.subr.mxu0 0.0
    %1379 = vmatpush1.msra.mxu0 0.0
    %1380 = vmatprep.subr.mxu0 0.0
    %1381 = vmatpush1.msra.mxu0 0.0
    %1382 = vmatprep.subr.mxu0 0.0
    %1383 = vmatpush1.msra.mxu0 0.0
    %1384 = vmatprep.subr.mxu0 0.0
    %1385 = vmatpush1.msra.mxu0 0.0
    %1386 = vmatprep.subr.mxu0 0.0
    %1387 = vmatpush1.msra.mxu0 0.0
    %1388 = vmatprep.subr.mxu0 0.0
    %1389 = vmatpush1.msra.mxu0 0.0
    %1390 = vmatprep.subr.mxu0 0.0
    %1391 = vmatpush1.msra.mxu0 0.0
    %1392 = vmatprep.subr.mxu0 0.0
    %1393 = vmatpush1.msra.mxu0 0.0
    %1394 = vmatprep.subr.mxu0 0.0
    %1395 = vmatpush1.msra.mxu0 0.0
    %1396 = vmatprep.subr.mxu0 0.0
    %1397 = vmatpush1.msra.mxu0 0.0
    %1398 = vmatprep.subr.mxu0 0.0
    %1399 = vmatpush1.msra.mxu0 0.0
    %1400 = vmatprep.subr.mxu0 0.0
    %1401 = vmatpush1.msra.mxu0 0.0
    %1402 = vmatprep.subr.mxu0 0.0
    %1403 = vmatpush1.msra.mxu0 0.0
    %1404 = vmatprep.subr.mxu0 0.0
    %1405 = vmatpush1.msra.mxu0 0.0
    %1406 = vmatprep.subr.mxu0 0.0
    %1407 = vmatpush1.msra.mxu0 0.0
    %1408 = vmatprep.subr.mxu0 0.0
    %1409 = vmatpush1.msra.mxu0 0.0
    %1410 = vmatprep.subr.mxu0 0.0
    %1411 = vmatpush1.msra.mxu0 0.0
    %1412 = vmatprep.subr.mxu0 0.0
    %1413 = vmatpush1.msra.mxu0 0.0
    %1414 = vmatprep.subr.mxu0 0.0
    %1415 = vmatpush1.msra.mxu0 0.0
    %1416 = vmatprep.subr.mxu0 0.0
    %1417 = vmatpush1.msra.mxu0 0.0
    %1418 = vmatprep.mubr.f32.mxu0 0.0
    %v1419 = vand.u32 %v1098, 4294901760
    %v1420 = vsub.f32 %v1098, %v1419
    %v1421 = vand.u32 %v1420, 4294901760
    %1422 = vmatmul.mubr.f32.gmra.mrb[0].mxu0 %v1421
    %v1423 = vpop.f32.mrb[0].mxu0
    %v1424 = vadd.f32 %v1347, %v1423
    %v1425 = vpop.f32.mrb[0].mxu0
    %1426 = vdwg.mxu0
    %1427 = vmatprep.subr.mxu0 0.0
    %v1428 = vand.u32 %v1086, 4294901760
    %v1429 = vsub.f32 %v1086, %v1428
    %v1430 = vand.u32 %v1429, 4294901760
    %1431 = vmatpush1.msra.mxu0 %v1430
    %1432 = vmatprep.subr.mxu0 0.0
    %v1433 = vand.u32 %v1087, 4294901760
    %v1434 = vsub.f32 %v1087, %v1433
    %v1435 = vand.u32 %v1434, 4294901760
    %1436 = vmatpush1.msra.mxu0 %v1435
    %1437 = vmatprep.subr.mxu0 0.0
    %v1438 = vand.u32 %v1088, 4294901760
    %v1439 = vsub.f32 %v1088, %v1438
    %v1440 = vand.u32 %v1439, 4294901760
    %1441 = vmatpush1.msra.mxu0 %v1440
    %1442 = vmatprep.subr.mxu0 0.0
    %v1443 = vand.u32 %v1089, 4294901760
    %v1444 = vsub.f32 %v1089, %v1443
    %v1445 = vand.u32 %v1444, 4294901760
    %1446 = vmatpush1.msra.mxu0 %v1445
    %1447 = vmatprep.subr.mxu0 0.0
    %1448 = vmatpush1.msra.mxu0 0.0
    %1449 = vmatprep.subr.mxu0 0.0
    %1450 = vmatpush1.msra.mxu0 0.0
    %1451 = vmatprep.subr.mxu0 0.0
    %1452 = vmatpush1.msra.mxu0 0.0
    %1453 = vmatprep.subr.mxu0 0.0
    %1454 = vmatpush1.msra.mxu0 0.0
    %1455 = vmatprep.subr.mxu0 0.0
    %1456 = vmatpush1.msra.mxu0 0.0
    %1457 = vmatprep.subr.mxu0 0.0
    %1458 = vmatpush1.msra.mxu0 0.0
    %1459 = vmatprep.subr.mxu0 0.0
    %1460 = vmatpush1.msra.mxu0 0.0
    %1461 = vmatprep.subr.mxu0 0.0
    %1462 = vmatpush1.msra.mxu0 0.0
    %1463 = vmatprep.subr.mxu0 0.0
    %1464 = vmatpush1.msra.mxu0 0.0
    %1465 = vmatprep.subr.mxu0 0.0
    %1466 = vmatpush1.msra.mxu0 0.0
    %1467 = vmatprep.subr.mxu0 0.0
    %1468 = vmatpush1.msra.mxu0 0.0
    %1469 = vmatprep.subr.mxu0 0.0
    %1470 = vmatpush1.msra.mxu0 0.0
    %1471 = vmatprep.subr.mxu0 0.0
    %1472 = vmatpush1.msra.mxu0 0.0
    %1473 = vmatprep.subr.mxu0 0.0
    %1474 = vmatpush1.msra.mxu0 0.0
    %1475 = vmatprep.subr.mxu0 0.0
    %1476 = vmatpush1.msra.mxu0 0.0
    %1477 = vmatprep.subr.mxu0 0.0
    %1478 = vmatpush1.msra.mxu0 0.0
    %1479 = vmatprep.subr.mxu0 0.0
    %1480 = vmatpush1.msra.mxu0 0.0
    %1481 = vmatprep.subr.mxu0 0.0
    %1482 = vmatpush1.msra.mxu0 0.0
    %1483 = vmatprep.subr.mxu0 0.0
    %1484 = vmatpush1.msra.mxu0 0.0
    %1485 = vmatprep.subr.mxu0 0.0
    %1486 = vmatpush1.msra.mxu0 0.0
    %1487 = vmatprep.subr.mxu0 0.0
    %1488 = vmatpush1.msra.mxu0 0.0
    %1489 = vmatprep.subr.mxu0 0.0
    %1490 = vmatpush1.msra.mxu0 0.0
    %1491 = vmatprep.subr.mxu0 0.0
    %1492 = vmatpush1.msra.mxu0 0.0
    %1493 = vmatprep.subr.mxu0 0.0
    %1494 = vmatpush1.msra.mxu0 0.0
    %1495 = vmatprep.subr.mxu0 0.0
    %1496 = vmatpush1.msra.mxu0 0.0
    %1497 = vmatprep.subr.mxu0 0.0
    %1498 = vmatpush1.msra.mxu0 0.0
    %1499 = vmatprep.subr.mxu0 0.0
    %1500 = vmatpush1.msra.mxu0 0.0
    %1501 = vmatprep.subr.mxu0 0.0
    %1502 = vmatpush1.msra.mxu0 0.0
    %1503 = vmatprep.mubr.f32.mxu0 0.0
    %v1504 = vand.u32 %v1098, 4294901760
    %1505 = vmatmul.mubr.f32.gmra.mrb[0].mxu0 %v1504
    %v1506 = vpop.f32.mrb[0].mxu0
    %v1507 = vadd.f32 %v1424, %v1506
    %v1508 = vpop.f32.mrb[0].mxu0
    %1509 = vdwg.mxu0
    %1510 = vmatprep.subr.mxu0 0.0
    %v1511 = vand.u32 %v1086, 4294901760
    %1512 = vmatpush1.msra.mxu0 %v1511
    %1513 = vmatprep.subr.mxu0 0.0
    %v1514 = vand.u32 %v1087, 4294901760
    %1515 = vmatpush1.msra.mxu0 %v1514
    %1516 = vmatprep.subr.mxu0 0.0
    %v1517 = vand.u32 %v1088, 4294901760
    %1518 = vmatpush1.msra.mxu0 %v1517
    %1519 = vmatprep.subr.mxu0 0.0
    %v1520 = vand.u32 %v1089, 4294901760
    %1521 = vmatpush1.msra.mxu0 %v1520
    %1522 = vmatprep.subr.mxu0 0.0
    %1523 = vmatpush1.msra.mxu0 0.0
    %1524 = vmatprep.subr.mxu0 0.0
    %1525 = vmatpush1.msra.mxu0 0.0
    %1526 = vmatprep.subr.mxu0 0.0
    %1527 = vmatpush1.msra.mxu0 0.0
    %1528 = vmatprep.subr.mxu0 0.0
    %1529 = vmatpush1.msra.mxu0 0.0
    %1530 = vmatprep.subr.mxu0 0.0
    %1531 = vmatpush1.msra.mxu0 0.0
    %1532 = vmatprep.subr.mxu0 0.0
    %1533 = vmatpush1.msra.mxu0 0.0
    %1534 = vmatprep.subr.mxu0 0.0
    %1535 = vmatpush1.msra.mxu0 0.0
    %1536 = vmatprep.subr.mxu0 0.0
    %1537 = vmatpush1.msra.mxu0 0.0
    %1538 = vmatprep.subr.mxu0 0.0
    %1539 = vmatpush1.msra.mxu0 0.0
    %1540 = vmatprep.subr.mxu0 0.0
    %1541 = vmatpush1.msra.mxu0 0.0
    %1542 = vmatprep.subr.mxu0 0.0
    %1543 = vmatpush1.msra.mxu0 0.0
    %1544 = vmatprep.subr.mxu0 0.0
    %1545 = vmatpush1.msra.mxu0 0.0
    %1546 = vmatprep.subr.mxu0 0.0
    %1547 = vmatpush1.msra.mxu0 0.0
    %1548 = vmatprep.subr.mxu0 0.0
    %1549 = vmatpush1.msra.mxu0 0.0
    %1550 = vmatprep.subr.mxu0 0.0
    %1551 = vmatpush1.msra.mxu0 0.0
    %1552 = vmatprep.subr.mxu0 0.0
    %1553 = vmatpush1.msra.mxu0 0.0
    %1554 = vmatprep.subr.mxu0 0.0
    %1555 = vmatpush1.msra.mxu0 0.0
    %1556 = vmatprep.subr.mxu0 0.0
    %1557 = vmatpush1.msra.mxu0 0.0
    %1558 = vmatprep.subr.mxu0 0.0
    %1559 = vmatpush1.msra.mxu0 0.0
    %1560 = vmatprep.subr.mxu0 0.0
    %1561 = vmatpush1.msra.mxu0 0.0
    %1562 = vmatprep.subr.mxu0 0.0
    %1563 = vmatpush1.msra.mxu0 0.0
    %1564 = vmatprep.subr.mxu0 0.0
    %1565 = vmatpush1.msra.mxu0 0.0
    %1566 = vmatprep.subr.mxu0 0.0
    %1567 = vmatpush1.msra.mxu0 0.0
    %1568 = vmatprep.subr.mxu0 0.0
    %1569 = vmatpush1.msra.mxu0 0.0
    %1570 = vmatprep.subr.mxu0 0.0
    %1571 = vmatpush1.msra.mxu0 0.0
    %1572 = vmatprep.subr.mxu0 0.0
    %1573 = vmatpush1.msra.mxu0 0.0
    %1574 = vmatprep.subr.mxu0 0.0
    %1575 = vmatpush1.msra.mxu0 0.0
    %1576 = vmatprep.subr.mxu0 0.0
    %1577 = vmatpush1.msra.mxu0 0.0
    %1578 = vmatprep.mubr.f32.mxu0 0.0
    %v1579 = vand.u32 %v1098, 4294901760
    %1580 = vmatmul.mubr.f32.gmra.mrb[0].mxu0 %v1579
    %v1581 = vpop.f32.mrb[0].mxu0
    %v1582 = vadd.f32 %v1507, %v1581
    %v1583 = vpop.f32.mrb[0].mxu0
    %1584 = vdwg.mxu0
    %v1585 = vmax.f32 %v1582, 0.0
    %1586 = vst [vmem:[#allocation2] sm:$0xff] %v1585
    // Predicated region
    $region30: #{tpu_custom_call.1} parent=1 // pred_check
      _
    $region31: #{tpu_custom_call.1} parent=1 // pred_check_branch
      %1588 = sbr.rel (0) target = $region33
    $region32: #{tpu_custom_call.1} parent=1 // pred_region
      %s1590 = ssub.s32 128, 128
      %1591 = vsyncadd [#allocation3], %s1590
      %s1593 = sshll.u32 [#allocation2], 4
      %s1594 = int_to_ptr.vmem [resolvable:$true] %s1593
      %1596 = dma.vmem_to_hbm [thread:$0]  %s1594, 128, %s7, [#allocation3]
    $region33: #{tpu_custom_call.1} parent=1 // pred_fallthru
      _
    // Predicated region
    $region34: #{tpu_custom_call.1} parent=1 // pred_check
      _
    $region35: #{tpu_custom_call.1} parent=1 // pred_check_branch
      %1598 = sbr.rel (0) target = $region37
    $region36: #{tpu_custom_call.1} parent=1 // pred_region
      %1599 = dma.done [#allocation3], 128
    $region37: #{tpu_custom_call.1} parent=1 // pred_fallthru
      _
    %1600 = vsyncpa [#allocation3], 1

</llo_original>
